<compile_context>
chip_gen: v5e
topology: v5e:2x2
jax: 0.10.0
libtpu: 0.0.40
codegen_flags: <defaults>
</compile_context>

<pallas_src>
import math

import jax
import jax.numpy as jnp
from jax import lax
from jax.experimental import pallas as pl
from jax.experimental.pallas import tpu as pltpu

# ---------------- small BERT config (synthetic) ----------------
VOCAB = 64
TYPE_VOCAB = 2
MAX_POS = 16
HIDDEN = 32
NUM_HEADS = 4
HEAD_DIM = HIDDEN // NUM_HEADS
INTERMEDIATE = 64
NUM_LAYERS = 2
LN_EPS = 1e-12
ATTN_SCALE = 1.0 / math.sqrt(HEAD_DIM)
INV_SQRT2 = 1.0 / math.sqrt(2.0)


# ---------------- in-kernel helpers (value-level, traced inside the kernel) ----------------
def _layernorm(x, g, b):
    mean = jnp.mean(x, axis=-1, keepdims=True)
    var = jnp.mean(jnp.square(x - mean), axis=-1, keepdims=True)
    return (x - mean) * lax.rsqrt(var + LN_EPS) * g + b


def _gelu_exact(x):
    # BERT uses exact (erf) GELU.
    return 0.5 * x * (1.0 + lax.erf(x * INV_SQRT2))


# ---------------- the fused per-batch-element kernel ----------------
def _finbert_kernel(ids_ref, mask_ref, wemb_ref, postype_ref, embln_ref,
                    wqkv_ref, bqkv_ref, wo_ref, lvec_ref,
                    w1_ref, b1_ref, w2_ref,
                    poolw_ref, poolb_ref, regw_ref, regb_ref,
                    out_ref):
    f32 = jnp.float32
    S = postype_ref.shape[0]
    H, NH, Dh = HIDDEN, NUM_HEADS, HEAD_DIM

    # ---- embedding: in-kernel one-hot gather (word) + pos/token-type + LayerNorm ----
    ids = ids_ref[0]                                                    # (S, 1) int32
    vocab_iota = lax.broadcasted_iota(jnp.int32, (S, VOCAB), 1)
    onehot = (vocab_iota == ids).astype(f32)                            # (S, VOCAB)
    word = jnp.dot(onehot, wemb_ref[...], preferred_element_type=f32)   # (S, H)
    emb = word + postype_ref[...]
    h = _layernorm(emb, embln_ref[0:1, :], embln_ref[1:2, :])           # (S, H)

    # additive key mask for this batch element, computed ONCE (hoisted out of the layer loop)
    bias = (1.0 - mask_ref[0]) * -10000.0                               # (1, S)

    for l in range(NUM_LAYERS):
        lv = lvec_ref[l]                                                # (6, H): bo, ln1_g, ln1_b, b2, ln2_g, ln2_b

        # --- self attention: fused QKV matmul, head-batched score/context einsums ---
        qkv = jnp.dot(h, wqkv_ref[l], preferred_element_type=f32) + bqkv_ref[l]   # (S, 3H)
        q = jnp.stack([qkv[:, 0 * H + n * Dh: 0 * H + (n + 1) * Dh] for n in range(NH)], axis=0)
        k = jnp.stack([qkv[:, 1 * H + n * Dh: 1 * H + (n + 1) * Dh] for n in range(NH)], axis=0)
        v = jnp.stack([qkv[:, 2 * H + n * Dh: 2 * H + (n + 1) * Dh] for n in range(NH)], axis=0)
        # (NH, S, Dh) each; heads act as the batch dim of the flash-style einsums below.
        s = jnp.einsum('nsd,ntd->nst', q, k, preferred_element_type=f32) * ATTN_SCALE + bias
        s = s - jnp.max(s, axis=-1, keepdims=True)
        p = jnp.exp(s)
        p = p / jnp.sum(p, axis=-1, keepdims=True)                      # exact softmax normalization
        ctx = jnp.einsum('nst,ntd->nsd', p, v, preferred_element_type=f32)         # (NH, S, Dh)

        # concat heads on the lane dim -> single output-projection matmul
        ctx_cat = jnp.concatenate([ctx[n] for n in range(NH)], axis=-1)             # (S, H)
        attn = jnp.dot(ctx_cat, wo_ref[l], preferred_element_type=f32) + lv[0:1, :]

        # residual + LayerNorm kept as traced values (no VMEM scratch round-trip)
        h = _layernorm(attn + h, lv[1:2, :], lv[2:3, :])

        # --- feed-forward ---
        ffn = _gelu_exact(jnp.dot(h, w1_ref[l], preferred_element_type=f32) + b1_ref[l])
        ffn = jnp.dot(ffn, w2_ref[l], preferred_element_type=f32) + lv[3:4, :]
        h = _layernorm(ffn + h, lv[4:5, :], lv[5:6, :])

    # ---- BERT pooler (tanh) + regressor, CLS row only ----
    cls = h[0:1, :]                                                     # (1, H)
    pooled = jnp.tanh(jnp.dot(cls, poolw_ref[...], preferred_element_type=f32) + poolb_ref[...])
    out_ref[0] = jnp.dot(pooled, regw_ref[...], preferred_element_type=f32) + regb_ref[...]


# ---------------- pallas_call wrapper ----------------
def _const_spec(shape):
    nd = len(shape)
    return pl.BlockSpec(tuple(shape), lambda b, _nd=nd: (0,) * _nd)


def _batched_spec(shape):
    nd = len(shape)
    return pl.BlockSpec((1,) + tuple(shape[1:]),
                        lambda b, _nd=nd: (b,) + (0,) * (_nd - 1))


def finbert_fused_call(input_ids, attention_mask, p):
    B, S = input_ids.shape
    ids = input_ids.astype(jnp.int32).reshape(B, S, 1)
    mask = attention_mask.astype(jnp.float32).reshape(B, 1, S)
    # Position + token-type embeddings folded into one (S, H) operand.
    # TODO(synk): token_type_ids are hard-coded to zeros (matches the PyTorch call signature,
    # which never passes segment ids).
    pos_type = (p["pos_emb"][:S] + p["type_emb"][0][None, :]).astype(jnp.float32)   # (S, H)

    operands = [
        ids, mask,
        p["word_emb"], pos_type, p["emb_ln"],
        p["wqkv"], p["bqkv"], p["wo"], p["layer_vecs"],
        p["w1"], p["b1"], p["w2"],
        p["pool_w"], p["pool_b"], p["reg_w"], p["reg_b"],
    ]
    in_specs = [_batched_spec(ids.shape), _batched_spec(mask.shape)] + \
               [_const_spec(x.shape) for x in operands[2:]]

    out = pl.pallas_call(
        _finbert_kernel,
        out_shape=jax.ShapeDtypeStruct((B, 1, 1), jnp.float32),
        grid=(B,),
        in_specs=in_specs,
        out_specs=pl.BlockSpec((1, 1, 1), lambda b: (b, 0, 0)),
        compiler_params=pltpu.CompilerParams(dimension_semantics=("parallel",)),
    )(*operands)
    return out.reshape(B)


# ---------------- parameter construction (deterministic, synthetic) ----------------
def init_params(key):
    L, H, I = NUM_LAYERS, HIDDEN, INTERMEDIATE

    def nrm(k, shape):
        return (0.02 * jax.random.normal(k, shape)).astype(jnp.float32)

    keys = iter(jax.random.split(key, 5 + 6 * L))
    word_emb = nrm(next(keys), (VOCAB, H))
    pos_emb = nrm(next(keys), (MAX_POS, H))
    type_emb = nrm(next(keys), (TYPE_VOCAB, H))
    pool_w = nrm(next(keys), (H, H))
    reg_w = nrm(next(keys), (H, 1))

    wq = jnp.stack([nrm(next(keys), (H, H)) for _ in range(L)])
    wk = jnp.stack([nrm(next(keys), (H, H)) for _ in range(L)])
    wv = jnp.stack([nrm(next(keys), (H, H)) for _ in range(L)])
    wo = jnp.stack([nrm(next(keys), (H, H)) for _ in range(L)])
    w1 = jnp.stack([nrm(next(keys), (H, I)) for _ in range(L)])
    w2 = jnp.stack([nrm(next(keys), (I, H)) for _ in range(L)])

    # Fused QKV weight: lanes ordered [Q(heads 0..NH-1), K(...), V(...)].
    wqkv = jnp.concatenate([wq, wk, wv], axis=-1)                       # (L, H, 3H)
    bqkv = jnp.zeros((L, 1, 3 * H), jnp.float32)

    zeros_h = jnp.zeros((L, 1, H), jnp.float32)
    ones_h = jnp.ones((L, 1, H), jnp.float32)
    # Packed per-layer H-sized vectors: [bo, ln1_g, ln1_b, b2, ln2_g, ln2_b].
    layer_vecs = jnp.concatenate([zeros_h, ones_h, zeros_h, zeros_h, ones_h, zeros_h], axis=1)

    return {
        "word_emb": word_emb,
        "pos_emb": pos_emb,
        "type_emb": type_emb,
        "emb_ln": jnp.concatenate([jnp.ones((1, H), jnp.float32),
                                   jnp.zeros((1, H), jnp.float32)], axis=0),   # (2, H): gamma, beta
        "wqkv": wqkv, "bqkv": bqkv, "wo": wo, "layer_vecs": layer_vecs,
        "w1": w1, "b1": jnp.zeros((L, 1, I), jnp.float32), "w2": w2,
        "pool_w": pool_w, "pool_b": jnp.zeros((1, H), jnp.float32),
        "reg_w": reg_w, "reg_b": jnp.zeros((1, 1), jnp.float32),
    }


# ---------------- forward pass (== FinBERTRegressor.forward) ----------------
def finbert_regressor_forward(params, input_ids, attention_mask):
    # Entire forward (embeddings -> encoder -> pooler -> regressor) runs inside one pallas_call.
    return finbert_fused_call(input_ids, attention_mask, params)        # (B,)


if __name__ == "__main__":
    B, S = 2, 8
    key = jax.random.PRNGKey(0)
    k_params, k_ids = jax.random.split(key)
    params = init_params(k_params)
    input_ids = jax.random.randint(k_ids, (B, S), 0, VOCAB, dtype=jnp.int32)
    attention_mask = jnp.array(
        [[1, 1, 1, 1, 1, 1, 0, 0],
         [1, 1, 1, 1, 1, 1, 1, 1]], dtype=jnp.int32)

    out = finbert_regressor_forward(params, input_ids, attention_mask)
    out = jax.block_until_ready(out)
    assert out.shape == (B,) and out.dtype == jnp.float32
    assert bool(jnp.all(jnp.isfinite(out)))
    print("KERNEL_OK")
</pallas_src>

<mosaic_0001>
module attributes {stable_mosaic.version = 11 : i64} {
  func.func @_finbert_kernel(%arg0: i32, %arg1: memref<1x8x1xi32, #tpu.memory_space<vmem>>, %arg2: memref<1x1x8xf32, #tpu.memory_space<vmem>>, %arg3: memref<64x32xf32, #tpu.memory_space<vmem>>, %arg4: memref<8x32xf32, #tpu.memory_space<vmem>>, %arg5: memref<2x32xf32, #tpu.memory_space<vmem>>, %arg6: memref<2x32x96xf32, #tpu.memory_space<vmem>>, %arg7: memref<2x1x96xf32, #tpu.memory_space<vmem>>, %arg8: memref<2x32x32xf32, #tpu.memory_space<vmem>>, %arg9: memref<2x6x32xf32, #tpu.memory_space<vmem>>, %arg10: memref<2x32x64xf32, #tpu.memory_space<vmem>>, %arg11: memref<2x1x64xf32, #tpu.memory_space<vmem>>, %arg12: memref<2x64x32xf32, #tpu.memory_space<vmem>>, %arg13: memref<32x32xf32, #tpu.memory_space<vmem>>, %arg14: memref<1x32xf32, #tpu.memory_space<vmem>>, %arg15: memref<32x1xf32, #tpu.memory_space<vmem>>, %arg16: memref<1x1xf32, #tpu.memory_space<vmem>>, %arg17: memref<1x1x1xf32, #tpu.memory_space<vmem>>) attributes {dimension_semantics = [#tpu.dimension_semantics<parallel>], iteration_bounds = array<i64: 2>, scalar_prefetch = 0 : i64, scratch_operands = 0 : i64, tpu.core_type = #tpu.core_type<tc>, window_params = [{transform_indices = @transform_0, window_bounds = array<i64: 1, 8, 1>}, {transform_indices = @transform_1, window_bounds = array<i64: 1, 1, 8>}, {pipeline_mode = #tpu.pipeline_mode<synchronous>, transform_indices = @transform_2, window_bounds = array<i64: 64, 32>}, {pipeline_mode = #tpu.pipeline_mode<synchronous>, transform_indices = @transform_3, window_bounds = array<i64: 8, 32>}, {pipeline_mode = #tpu.pipeline_mode<synchronous>, transform_indices = @transform_4, window_bounds = array<i64: 2, 32>}, {pipeline_mode = #tpu.pipeline_mode<synchronous>, transform_indices = @transform_5, window_bounds = array<i64: 2, 32, 96>}, {pipeline_mode = #tpu.pipeline_mode<synchronous>, transform_indices = @transform_6, window_bounds = array<i64: 2, 1, 96>}, {pipeline_mode = #tpu.pipeline_mode<synchronous>, transform_indices = @transform_7, window_bounds = array<i64: 2, 32, 32>}, {pipeline_mode = #tpu.pipeline_mode<synchronous>, transform_indices = @transform_8, window_bounds = array<i64: 2, 6, 32>}, {pipeline_mode = #tpu.pipeline_mode<synchronous>, transform_indices = @transform_9, window_bounds = array<i64: 2, 32, 64>}, {pipeline_mode = #tpu.pipeline_mode<synchronous>, transform_indices = @transform_10, window_bounds = array<i64: 2, 1, 64>}, {pipeline_mode = #tpu.pipeline_mode<synchronous>, transform_indices = @transform_11, window_bounds = array<i64: 2, 64, 32>}, {pipeline_mode = #tpu.pipeline_mode<synchronous>, transform_indices = @transform_12, window_bounds = array<i64: 32, 32>}, {pipeline_mode = #tpu.pipeline_mode<synchronous>, transform_indices = @transform_13, window_bounds = array<i64: 1, 32>}, {pipeline_mode = #tpu.pipeline_mode<synchronous>, transform_indices = @transform_14, window_bounds = array<i64: 32, 1>}, {pipeline_mode = #tpu.pipeline_mode<synchronous>, transform_indices = @transform_15, window_bounds = array<i64: 1, 1>}, {transform_indices = @transform_16, window_bounds = array<i64: 1, 1, 1>}]} {
    %c0 = arith.constant 0 : index
    %c0_0 = arith.constant 0 : index
    %c0_1 = arith.constant 0 : index
    %0 = vector.load %arg1[%c0, %c0_0, %c0_1] : memref<1x8x1xi32, #tpu.memory_space<vmem>>, vector<1x8x1xi32>
    %1 = vector.shape_cast %0 : vector<1x8x1xi32> to vector<8x1xi32>
    %2 = tpu.iota {dimensions = array<i32: 1>} : vector<8x64xi32>
    %3 = vector.broadcast %1 : vector<8x1xi32> to vector<8x64xi32>
    %4 = arith.cmpi eq, %2, %3 : vector<8x64xi32>
    %5 = arith.extui %4 : vector<8x64xi1> to vector<8x64xi32>
    %6 = arith.sitofp %5 : vector<8x64xi32> to vector<8x64xf32>
    %c0_2 = arith.constant 0 : index
    %c0_3 = arith.constant 0 : index
    %7 = vector.load %arg3[%c0_2, %c0_3] : memref<64x32xf32, #tpu.memory_space<vmem>>, vector<64x32xf32>
    %cst = arith.constant dense<0.000000e+00> : vector<8x32xf32>
    %8 = tpu.matmul %6, %7, %cst {dimension_numbers = #tpu.dot_dimension_numbers<[1], [0], [0], [1], [0, 0, 1, 1], [], []>} : vector<8x64xf32>, vector<64x32xf32>, vector<8x32xf32> -> vector<8x32xf32>
    %c0_4 = arith.constant 0 : index
    %c0_5 = arith.constant 0 : index
    %9 = vector.load %arg4[%c0_4, %c0_5] : memref<8x32xf32, #tpu.memory_space<vmem>>, vector<8x32xf32>
    %10 = arith.addf %8, %9 : vector<8x32xf32>
    %c0_6 = arith.constant 0 : index
    %c0_7 = arith.constant 0 : index
    %11 = vector.load %arg5[%c0_6, %c0_7] : memref<2x32xf32, #tpu.memory_space<vmem>>, vector<1x32xf32>
    %c1 = arith.constant 1 : index
    %c0_8 = arith.constant 0 : index
    %12 = vector.load %arg5[%c1, %c0_8] : memref<2x32xf32, #tpu.memory_space<vmem>>, vector<1x32xf32>
    %cst_9 = arith.constant dense<0.000000e+00> : vector<8xf32>
    %13 = vector.multi_reduction <add>, %10, %cst_9 [1] : vector<8x32xf32> to vector<8xf32>
    %14 = vector.shape_cast %13 : vector<8xf32> to vector<8x1xf32>
    %cst_10 = arith.constant 3.200000e+01 : f32
    %15 = vector.broadcast %cst_10 : f32 to vector<8x1xf32>
    %16 = arith.divf %14, %15 : vector<8x1xf32>
    %17 = vector.broadcast %16 : vector<8x1xf32> to vector<8x32xf32>
    %18 = arith.subf %10, %17 : vector<8x32xf32>
    %19 = arith.mulf %18, %18 : vector<8x32xf32>
    %cst_11 = arith.constant dense<0.000000e+00> : vector<8xf32>
    %20 = vector.multi_reduction <add>, %19, %cst_11 [1] : vector<8x32xf32> to vector<8xf32>
    %21 = vector.shape_cast %20 : vector<8xf32> to vector<8x1xf32>
    %cst_12 = arith.constant 3.200000e+01 : f32
    %22 = vector.broadcast %cst_12 : f32 to vector<8x1xf32>
    %23 = arith.divf %21, %22 : vector<8x1xf32>
    %24 = vector.broadcast %16 : vector<8x1xf32> to vector<8x32xf32>
    %25 = arith.subf %10, %24 : vector<8x32xf32>
    %cst_13 = arith.constant 9.99999996E-13 : f32
    %26 = vector.broadcast %cst_13 : f32 to vector<8x1xf32>
    %27 = arith.addf %23, %26 : vector<8x1xf32>
    %28 = math.rsqrt %27 : vector<8x1xf32>
    %29 = vector.broadcast %28 : vector<8x1xf32> to vector<8x32xf32>
    %30 = arith.mulf %25, %29 : vector<8x32xf32>
    %31 = vector.broadcast %11 : vector<1x32xf32> to vector<8x32xf32>
    %32 = arith.mulf %30, %31 : vector<8x32xf32>
    %33 = vector.broadcast %12 : vector<1x32xf32> to vector<8x32xf32>
    %34 = arith.addf %32, %33 : vector<8x32xf32>
    %c0_14 = arith.constant 0 : index
    %c0_15 = arith.constant 0 : index
    %c0_16 = arith.constant 0 : index
    %35 = vector.load %arg2[%c0_14, %c0_15, %c0_16] : memref<1x1x8xf32, #tpu.memory_space<vmem>>, vector<1x1x8xf32>
    %36 = vector.shape_cast %35 : vector<1x1x8xf32> to vector<1x8xf32>
    %cst_17 = arith.constant 1.000000e+00 : f32
    %37 = vector.broadcast %cst_17 : f32 to vector<1x8xf32>
    %38 = arith.subf %37, %36 : vector<1x8xf32>
    %cst_18 = arith.constant -1.000000e+04 : f32
    %39 = vector.broadcast %cst_18 : f32 to vector<1x8xf32>
    %40 = arith.mulf %38, %39 : vector<1x8xf32>
    %c0_19 = arith.constant 0 : index
    %c0_20 = arith.constant 0 : index
    %c0_21 = arith.constant 0 : index
    %41 = vector.load %arg9[%c0_19, %c0_20, %c0_21] : memref<2x6x32xf32, #tpu.memory_space<vmem>>, vector<1x6x32xf32>
    %42 = vector.shape_cast %41 : vector<1x6x32xf32> to vector<6x32xf32>
    %c0_22 = arith.constant 0 : index
    %c0_23 = arith.constant 0 : index
    %c0_24 = arith.constant 0 : index
    %43 = vector.load %arg6[%c0_22, %c0_23, %c0_24] : memref<2x32x96xf32, #tpu.memory_space<vmem>>, vector<1x32x96xf32>
    %44 = vector.shape_cast %43 : vector<1x32x96xf32> to vector<32x96xf32>
    %cst_25 = arith.constant dense<0.000000e+00> : vector<8x96xf32>
    %45 = tpu.matmul %34, %44, %cst_25 {dimension_numbers = #tpu.dot_dimension_numbers<[1], [0], [0], [1], [0, 0, 1, 1], [], []>} : vector<8x32xf32>, vector<32x96xf32>, vector<8x96xf32> -> vector<8x96xf32>
    %c0_26 = arith.constant 0 : index
    %c0_27 = arith.constant 0 : index
    %c0_28 = arith.constant 0 : index
    %46 = vector.load %arg7[%c0_26, %c0_27, %c0_28] : memref<2x1x96xf32, #tpu.memory_space<vmem>>, vector<1x1x96xf32>
    %47 = vector.shape_cast %46 : vector<1x1x96xf32> to vector<1x96xf32>
    %48 = vector.broadcast %47 : vector<1x96xf32> to vector<8x96xf32>
    %49 = arith.addf %45, %48 : vector<8x96xf32>
    %50 = vector.extract_strided_slice %49 {offsets = [0, 0], sizes = [8, 8], strides = [1, 1]} : vector<8x96xf32> to vector<8x8xf32>
    %51 = vector.extract_strided_slice %49 {offsets = [0, 8], sizes = [8, 8], strides = [1, 1]} : vector<8x96xf32> to vector<8x8xf32>
    %52 = vector.extract_strided_slice %49 {offsets = [0, 16], sizes = [8, 8], strides = [1, 1]} : vector<8x96xf32> to vector<8x8xf32>
    %53 = vector.extract_strided_slice %49 {offsets = [0, 24], sizes = [8, 8], strides = [1, 1]} : vector<8x96xf32> to vector<8x8xf32>
    %54 = vector.shape_cast %50 : vector<8x8xf32> to vector<1x8x8xf32>
    %55 = vector.shape_cast %51 : vector<8x8xf32> to vector<1x8x8xf32>
    %56 = vector.shape_cast %52 : vector<8x8xf32> to vector<1x8x8xf32>
    %57 = vector.shape_cast %53 : vector<8x8xf32> to vector<1x8x8xf32>
    %58 = tpu.concatenate %54, %55, %56, %57 in 0 : vector<1x8x8xf32>, vector<1x8x8xf32>, vector<1x8x8xf32>, vector<1x8x8xf32> -> vector<4x8x8xf32>
    %59 = vector.extract_strided_slice %49 {offsets = [0, 32], sizes = [8, 8], strides = [1, 1]} : vector<8x96xf32> to vector<8x8xf32>
    %60 = vector.extract_strided_slice %49 {offsets = [0, 40], sizes = [8, 8], strides = [1, 1]} : vector<8x96xf32> to vector<8x8xf32>
    %61 = vector.extract_strided_slice %49 {offsets = [0, 48], sizes = [8, 8], strides = [1, 1]} : vector<8x96xf32> to vector<8x8xf32>
    %62 = vector.extract_strided_slice %49 {offsets = [0, 56], sizes = [8, 8], strides = [1, 1]} : vector<8x96xf32> to vector<8x8xf32>
    %63 = vector.shape_cast %59 : vector<8x8xf32> to vector<1x8x8xf32>
    %64 = vector.shape_cast %60 : vector<8x8xf32> to vector<1x8x8xf32>
    %65 = vector.shape_cast %61 : vector<8x8xf32> to vector<1x8x8xf32>
    %66 = vector.shape_cast %62 : vector<8x8xf32> to vector<1x8x8xf32>
    %67 = tpu.concatenate %63, %64, %65, %66 in 0 : vector<1x8x8xf32>, vector<1x8x8xf32>, vector<1x8x8xf32>, vector<1x8x8xf32> -> vector<4x8x8xf32>
    %68 = vector.extract_strided_slice %49 {offsets = [0, 64], sizes = [8, 8], strides = [1, 1]} : vector<8x96xf32> to vector<8x8xf32>
    %69 = vector.extract_strided_slice %49 {offsets = [0, 72], sizes = [8, 8], strides = [1, 1]} : vector<8x96xf32> to vector<8x8xf32>
    %70 = vector.extract_strided_slice %49 {offsets = [0, 80], sizes = [8, 8], strides = [1, 1]} : vector<8x96xf32> to vector<8x8xf32>
    %71 = vector.extract_strided_slice %49 {offsets = [0, 88], sizes = [8, 8], strides = [1, 1]} : vector<8x96xf32> to vector<8x8xf32>
    %72 = vector.shape_cast %68 : vector<8x8xf32> to vector<1x8x8xf32>
    %73 = vector.shape_cast %69 : vector<8x8xf32> to vector<1x8x8xf32>
    %74 = vector.shape_cast %70 : vector<8x8xf32> to vector<1x8x8xf32>
    %75 = vector.shape_cast %71 : vector<8x8xf32> to vector<1x8x8xf32>
    %76 = tpu.concatenate %72, %73, %74, %75 in 0 : vector<1x8x8xf32>, vector<1x8x8xf32>, vector<1x8x8xf32>, vector<1x8x8xf32> -> vector<4x8x8xf32>
    "tpu.trace_start"() <{level = 10 : i32, message = "nsd,ntd->nst"}> : () -> ()
    %cst_29 = arith.constant dense<0.000000e+00> : vector<4x8x8xf32>
    %77 = tpu.matmul %58, %67, %cst_29 {dimension_numbers = #tpu.dot_dimension_numbers<[2], [2], [1], [1], [0, 0, 0, 1, 1, 1], [0], [0]>} : vector<4x8x8xf32>, vector<4x8x8xf32>, vector<4x8x8xf32> -> vector<4x8x8xf32>
    "tpu.trace_stop"() : () -> ()
    %cst_30 = arith.constant 0.353553385 : f32
    %78 = vector.broadcast %cst_30 : f32 to vector<4x8x8xf32>
    %79 = arith.mulf %77, %78 : vector<4x8x8xf32>
    %80 = vector.shape_cast %40 : vector<1x8xf32> to vector<1x1x8xf32>
    %81 = vector.broadcast %80 : vector<1x1x8xf32> to vector<4x8x8xf32>
    %82 = arith.addf %79, %81 : vector<4x8x8xf32>
    %cst_31 = arith.constant dense<0xFF800000> : vector<4x8xf32>
    %83 = vector.multi_reduction <maximumf>, %82, %cst_31 [2] : vector<4x8x8xf32> to vector<4x8xf32>
    %84 = vector.shape_cast %83 : vector<4x8xf32> to vector<4x8x1xf32>
    %85 = vector.broadcast %84 : vector<4x8x1xf32> to vector<4x8x8xf32>
    %86 = arith.subf %82, %85 : vector<4x8x8xf32>
    %87 = math.exp %86 : vector<4x8x8xf32>
    %cst_32 = arith.constant dense<0.000000e+00> : vector<4x8xf32>
    %88 = vector.multi_reduction <add>, %87, %cst_32 [2] : vector<4x8x8xf32> to vector<4x8xf32>
    %89 = vector.shape_cast %88 : vector<4x8xf32> to vector<4x8x1xf32>
    %90 = vector.broadcast %89 : vector<4x8x1xf32> to vector<4x8x8xf32>
    %91 = arith.divf %87, %90 : vector<4x8x8xf32>
    "tpu.trace_start"() <{level = 10 : i32, message = "nst,ntd->nsd"}> : () -> ()
    %cst_33 = arith.constant dense<0.000000e+00> : vector<4x8x8xf32>
    %92 = tpu.matmul %91, %76, %cst_33 {dimension_numbers = #tpu.dot_dimension_numbers<[2], [1], [1], [2], [0, 0, 0, 1, 1, 2], [0], [0]>} : vector<4x8x8xf32>, vector<4x8x8xf32>, vector<4x8x8xf32> -> vector<4x8x8xf32>
    "tpu.trace_stop"() : () -> ()
    %93 = vector.extract_strided_slice %92 {offsets = [0, 0, 0], sizes = [1, 8, 8], strides = [1, 1, 1]} : vector<4x8x8xf32> to vector<1x8x8xf32>
    %94 = vector.shape_cast %93 : vector<1x8x8xf32> to vector<8x8xf32>
    %95 = vector.extract_strided_slice %92 {offsets = [1, 0, 0], sizes = [1, 8, 8], strides = [1, 1, 1]} : vector<4x8x8xf32> to vector<1x8x8xf32>
    %96 = vector.shape_cast %95 : vector<1x8x8xf32> to vector<8x8xf32>
    %97 = vector.extract_strided_slice %92 {offsets = [2, 0, 0], sizes = [1, 8, 8], strides = [1, 1, 1]} : vector<4x8x8xf32> to vector<1x8x8xf32>
    %98 = vector.shape_cast %97 : vector<1x8x8xf32> to vector<8x8xf32>
    %99 = vector.extract_strided_slice %92 {offsets = [3, 0, 0], sizes = [1, 8, 8], strides = [1, 1, 1]} : vector<4x8x8xf32> to vector<1x8x8xf32>
    %100 = vector.shape_cast %99 : vector<1x8x8xf32> to vector<8x8xf32>
    %101 = tpu.concatenate %94, %96, %98, %100 in 1 : vector<8x8xf32>, vector<8x8xf32>, vector<8x8xf32>, vector<8x8xf32> -> vector<8x32xf32>
    %c0_34 = arith.constant 0 : index
    %c0_35 = arith.constant 0 : index
    %c0_36 = arith.constant 0 : index
    %102 = vector.load %arg8[%c0_34, %c0_35, %c0_36] : memref<2x32x32xf32, #tpu.memory_space<vmem>>, vector<1x32x32xf32>
    %103 = vector.shape_cast %102 : vector<1x32x32xf32> to vector<32x32xf32>
    %cst_37 = arith.constant dense<0.000000e+00> : vector<8x32xf32>
    %104 = tpu.matmul %101, %103, %cst_37 {dimension_numbers = #tpu.dot_dimension_numbers<[1], [0], [0], [1], [0, 0, 1, 1], [], []>} : vector<8x32xf32>, vector<32x32xf32>, vector<8x32xf32> -> vector<8x32xf32>
    %105 = vector.extract_strided_slice %42 {offsets = [0, 0], sizes = [1, 32], strides = [1, 1]} : vector<6x32xf32> to vector<1x32xf32>
    %106 = vector.broadcast %105 : vector<1x32xf32> to vector<8x32xf32>
    %107 = arith.addf %104, %106 : vector<8x32xf32>
    %108 = arith.addf %107, %34 : vector<8x32xf32>
    %109 = vector.extract_strided_slice %42 {offsets = [1, 0], sizes = [1, 32], strides = [1, 1]} : vector<6x32xf32> to vector<1x32xf32>
    %110 = vector.extract_strided_slice %42 {offsets = [2, 0], sizes = [1, 32], strides = [1, 1]} : vector<6x32xf32> to vector<1x32xf32>
    %cst_38 = arith.constant dense<0.000000e+00> : vector<8xf32>
    %111 = vector.multi_reduction <add>, %108, %cst_38 [1] : vector<8x32xf32> to vector<8xf32>
    %112 = vector.shape_cast %111 : vector<8xf32> to vector<8x1xf32>
    %cst_39 = arith.constant 3.200000e+01 : f32
    %113 = vector.broadcast %cst_39 : f32 to vector<8x1xf32>
    %114 = arith.divf %112, %113 : vector<8x1xf32>
    %115 = vector.broadcast %114 : vector<8x1xf32> to vector<8x32xf32>
    %116 = arith.subf %108, %115 : vector<8x32xf32>
    %117 = arith.mulf %116, %116 : vector<8x32xf32>
    %cst_40 = arith.constant dense<0.000000e+00> : vector<8xf32>
    %118 = vector.multi_reduction <add>, %117, %cst_40 [1] : vector<8x32xf32> to vector<8xf32>
    %119 = vector.shape_cast %118 : vector<8xf32> to vector<8x1xf32>
    %cst_41 = arith.constant 3.200000e+01 : f32
    %120 = vector.broadcast %cst_41 : f32 to vector<8x1xf32>
    %121 = arith.divf %119, %120 : vector<8x1xf32>
    %122 = vector.broadcast %114 : vector<8x1xf32> to vector<8x32xf32>
    %123 = arith.subf %108, %122 : vector<8x32xf32>
    %cst_42 = arith.constant 9.99999996E-13 : f32
    %124 = vector.broadcast %cst_42 : f32 to vector<8x1xf32>
    %125 = arith.addf %121, %124 : vector<8x1xf32>
    %126 = math.rsqrt %125 : vector<8x1xf32>
    %127 = vector.broadcast %126 : vector<8x1xf32> to vector<8x32xf32>
    %128 = arith.mulf %123, %127 : vector<8x32xf32>
    %129 = vector.broadcast %109 : vector<1x32xf32> to vector<8x32xf32>
    %130 = arith.mulf %128, %129 : vector<8x32xf32>
    %131 = vector.broadcast %110 : vector<1x32xf32> to vector<8x32xf32>
    %132 = arith.addf %130, %131 : vector<8x32xf32>
    %c0_43 = arith.constant 0 : index
    %c0_44 = arith.constant 0 : index
    %c0_45 = arith.constant 0 : index
    %133 = vector.load %arg10[%c0_43, %c0_44, %c0_45] : memref<2x32x64xf32, #tpu.memory_space<vmem>>, vector<1x32x64xf32>
    %134 = vector.shape_cast %133 : vector<1x32x64xf32> to vector<32x64xf32>
    %cst_46 = arith.constant dense<0.000000e+00> : vector<8x64xf32>
    %135 = tpu.matmul %132, %134, %cst_46 {dimension_numbers = #tpu.dot_dimension_numbers<[1], [0], [0], [1], [0, 0, 1, 1], [], []>} : vector<8x32xf32>, vector<32x64xf32>, vector<8x64xf32> -> vector<8x64xf32>
    %c0_47 = arith.constant 0 : index
    %c0_48 = arith.constant 0 : index
    %c0_49 = arith.constant 0 : index
    %136 = vector.load %arg11[%c0_47, %c0_48, %c0_49] : memref<2x1x64xf32, #tpu.memory_space<vmem>>, vector<1x1x64xf32>
    %137 = vector.shape_cast %136 : vector<1x1x64xf32> to vector<1x64xf32>
    %138 = vector.broadcast %137 : vector<1x64xf32> to vector<8x64xf32>
    %139 = arith.addf %135, %138 : vector<8x64xf32>
    %cst_50 = arith.constant 5.000000e-01 : f32
    %140 = vector.broadcast %cst_50 : f32 to vector<8x64xf32>
    %141 = arith.mulf %140, %139 : vector<8x64xf32>
    %cst_51 = arith.constant 0.707106769 : f32
    %142 = vector.broadcast %cst_51 : f32 to vector<8x64xf32>
    %143 = arith.mulf %139, %142 : vector<8x64xf32>
    %144 = math.erf %143 : vector<8x64xf32>
    %cst_52 = arith.constant 1.000000e+00 : f32
    %145 = vector.broadcast %cst_52 : f32 to vector<8x64xf32>
    %146 = arith.addf %145, %144 : vector<8x64xf32>
    %147 = arith.mulf %141, %146 : vector<8x64xf32>
    %c0_53 = arith.constant 0 : index
    %c0_54 = arith.constant 0 : index
    %c0_55 = arith.constant 0 : index
    %148 = vector.load %arg12[%c0_53, %c0_54, %c0_55] : memref<2x64x32xf32, #tpu.memory_space<vmem>>, vector<1x64x32xf32>
    %149 = vector.shape_cast %148 : vector<1x64x32xf32> to vector<64x32xf32>
    %cst_56 = arith.constant dense<0.000000e+00> : vector<8x32xf32>
    %150 = tpu.matmul %147, %149, %cst_56 {dimension_numbers = #tpu.dot_dimension_numbers<[1], [0], [0], [1], [0, 0, 1, 1], [], []>} : vector<8x64xf32>, vector<64x32xf32>, vector<8x32xf32> -> vector<8x32xf32>
    %151 = vector.extract_strided_slice %42 {offsets = [3, 0], sizes = [1, 32], strides = [1, 1]} : vector<6x32xf32> to vector<1x32xf32>
    %152 = vector.broadcast %151 : vector<1x32xf32> to vector<8x32xf32>
    %153 = arith.addf %150, %152 : vector<8x32xf32>
    %154 = arith.addf %153, %132 : vector<8x32xf32>
    %155 = vector.extract_strided_slice %42 {offsets = [4, 0], sizes = [1, 32], strides = [1, 1]} : vector<6x32xf32> to vector<1x32xf32>
    %156 = vector.extract_strided_slice %42 {offsets = [5, 0], sizes = [1, 32], strides = [1, 1]} : vector<6x32xf32> to vector<1x32xf32>
    %cst_57 = arith.constant dense<0.000000e+00> : vector<8xf32>
    %157 = vector.multi_reduction <add>, %154, %cst_57 [1] : vector<8x32xf32> to vector<8xf32>
    %158 = vector.shape_cast %157 : vector<8xf32> to vector<8x1xf32>
    %cst_58 = arith.constant 3.200000e+01 : f32
    %159 = vector.broadcast %cst_58 : f32 to vector<8x1xf32>
    %160 = arith.divf %158, %159 : vector<8x1xf32>
    %161 = vector.broadcast %160 : vector<8x1xf32> to vector<8x32xf32>
    %162 = arith.subf %154, %161 : vector<8x32xf32>
    %163 = arith.mulf %162, %162 : vector<8x32xf32>
    %cst_59 = arith.constant dense<0.000000e+00> : vector<8xf32>
    %164 = vector.multi_reduction <add>, %163, %cst_59 [1] : vector<8x32xf32> to vector<8xf32>
    %165 = vector.shape_cast %164 : vector<8xf32> to vector<8x1xf32>
    %cst_60 = arith.constant 3.200000e+01 : f32
    %166 = vector.broadcast %cst_60 : f32 to vector<8x1xf32>
    %167 = arith.divf %165, %166 : vector<8x1xf32>
    %168 = vector.broadcast %160 : vector<8x1xf32> to vector<8x32xf32>
    %169 = arith.subf %154, %168 : vector<8x32xf32>
    %cst_61 = arith.constant 9.99999996E-13 : f32
    %170 = vector.broadcast %cst_61 : f32 to vector<8x1xf32>
    %171 = arith.addf %167, %170 : vector<8x1xf32>
    %172 = math.rsqrt %171 : vector<8x1xf32>
    %173 = vector.broadcast %172 : vector<8x1xf32> to vector<8x32xf32>
    %174 = arith.mulf %169, %173 : vector<8x32xf32>
    %175 = vector.broadcast %155 : vector<1x32xf32> to vector<8x32xf32>
    %176 = arith.mulf %174, %175 : vector<8x32xf32>
    %177 = vector.broadcast %156 : vector<1x32xf32> to vector<8x32xf32>
    %178 = arith.addf %176, %177 : vector<8x32xf32>
    %c1_62 = arith.constant 1 : index
    %c0_63 = arith.constant 0 : index
    %c0_64 = arith.constant 0 : index
    %179 = vector.load %arg9[%c1_62, %c0_63, %c0_64] : memref<2x6x32xf32, #tpu.memory_space<vmem>>, vector<1x6x32xf32>
    %180 = vector.shape_cast %179 : vector<1x6x32xf32> to vector<6x32xf32>
    %c1_65 = arith.constant 1 : index
    %c0_66 = arith.constant 0 : index
    %c0_67 = arith.constant 0 : index
    %181 = vector.load %arg6[%c1_65, %c0_66, %c0_67] : memref<2x32x96xf32, #tpu.memory_space<vmem>>, vector<1x32x96xf32>
    %182 = vector.shape_cast %181 : vector<1x32x96xf32> to vector<32x96xf32>
    %cst_68 = arith.constant dense<0.000000e+00> : vector<8x96xf32>
    %183 = tpu.matmul %178, %182, %cst_68 {dimension_numbers = #tpu.dot_dimension_numbers<[1], [0], [0], [1], [0, 0, 1, 1], [], []>} : vector<8x32xf32>, vector<32x96xf32>, vector<8x96xf32> -> vector<8x96xf32>
    %c1_69 = arith.constant 1 : index
    %c0_70 = arith.constant 0 : index
    %c0_71 = arith.constant 0 : index
    %184 = vector.load %arg7[%c1_69, %c0_70, %c0_71] : memref<2x1x96xf32, #tpu.memory_space<vmem>>, vector<1x1x96xf32>
    %185 = vector.shape_cast %184 : vector<1x1x96xf32> to vector<1x96xf32>
    %186 = vector.broadcast %185 : vector<1x96xf32> to vector<8x96xf32>
    %187 = arith.addf %183, %186 : vector<8x96xf32>
    %188 = vector.extract_strided_slice %187 {offsets = [0, 0], sizes = [8, 8], strides = [1, 1]} : vector<8x96xf32> to vector<8x8xf32>
    %189 = vector.extract_strided_slice %187 {offsets = [0, 8], sizes = [8, 8], strides = [1, 1]} : vector<8x96xf32> to vector<8x8xf32>
    %190 = vector.extract_strided_slice %187 {offsets = [0, 16], sizes = [8, 8], strides = [1, 1]} : vector<8x96xf32> to vector<8x8xf32>
    %191 = vector.extract_strided_slice %187 {offsets = [0, 24], sizes = [8, 8], strides = [1, 1]} : vector<8x96xf32> to vector<8x8xf32>
    %192 = vector.shape_cast %188 : vector<8x8xf32> to vector<1x8x8xf32>
    %193 = vector.shape_cast %189 : vector<8x8xf32> to vector<1x8x8xf32>
    %194 = vector.shape_cast %190 : vector<8x8xf32> to vector<1x8x8xf32>
    %195 = vector.shape_cast %191 : vector<8x8xf32> to vector<1x8x8xf32>
    %196 = tpu.concatenate %192, %193, %194, %195 in 0 : vector<1x8x8xf32>, vector<1x8x8xf32>, vector<1x8x8xf32>, vector<1x8x8xf32> -> vector<4x8x8xf32>
    %197 = vector.extract_strided_slice %187 {offsets = [0, 32], sizes = [8, 8], strides = [1, 1]} : vector<8x96xf32> to vector<8x8xf32>
    %198 = vector.extract_strided_slice %187 {offsets = [0, 40], sizes = [8, 8], strides = [1, 1]} : vector<8x96xf32> to vector<8x8xf32>
    %199 = vector.extract_strided_slice %187 {offsets = [0, 48], sizes = [8, 8], strides = [1, 1]} : vector<8x96xf32> to vector<8x8xf32>
    %200 = vector.extract_strided_slice %187 {offsets = [0, 56], sizes = [8, 8], strides = [1, 1]} : vector<8x96xf32> to vector<8x8xf32>
    %201 = vector.shape_cast %197 : vector<8x8xf32> to vector<1x8x8xf32>
    %202 = vector.shape_cast %198 : vector<8x8xf32> to vector<1x8x8xf32>
    %203 = vector.shape_cast %199 : vector<8x8xf32> to vector<1x8x8xf32>
    %204 = vector.shape_cast %200 : vector<8x8xf32> to vector<1x8x8xf32>
    %205 = tpu.concatenate %201, %202, %203, %204 in 0 : vector<1x8x8xf32>, vector<1x8x8xf32>, vector<1x8x8xf32>, vector<1x8x8xf32> -> vector<4x8x8xf32>
    %206 = vector.extract_strided_slice %187 {offsets = [0, 64], sizes = [8, 8], strides = [1, 1]} : vector<8x96xf32> to vector<8x8xf32>
    %207 = vector.extract_strided_slice %187 {offsets = [0, 72], sizes = [8, 8], strides = [1, 1]} : vector<8x96xf32> to vector<8x8xf32>
    %208 = vector.extract_strided_slice %187 {offsets = [0, 80], sizes = [8, 8], strides = [1, 1]} : vector<8x96xf32> to vector<8x8xf32>
    %209 = vector.extract_strided_slice %187 {offsets = [0, 88], sizes = [8, 8], strides = [1, 1]} : vector<8x96xf32> to vector<8x8xf32>
    %210 = vector.shape_cast %206 : vector<8x8xf32> to vector<1x8x8xf32>
    %211 = vector.shape_cast %207 : vector<8x8xf32> to vector<1x8x8xf32>
    %212 = vector.shape_cast %208 : vector<8x8xf32> to vector<1x8x8xf32>
    %213 = vector.shape_cast %209 : vector<8x8xf32> to vector<1x8x8xf32>
    %214 = tpu.concatenate %210, %211, %212, %213 in 0 : vector<1x8x8xf32>, vector<1x8x8xf32>, vector<1x8x8xf32>, vector<1x8x8xf32> -> vector<4x8x8xf32>
    "tpu.trace_start"() <{level = 10 : i32, message = "nsd,ntd->nst"}> : () -> ()
    %cst_72 = arith.constant dense<0.000000e+00> : vector<4x8x8xf32>
    %215 = tpu.matmul %196, %205, %cst_72 {dimension_numbers = #tpu.dot_dimension_numbers<[2], [2], [1], [1], [0, 0, 0, 1, 1, 1], [0], [0]>} : vector<4x8x8xf32>, vector<4x8x8xf32>, vector<4x8x8xf32> -> vector<4x8x8xf32>
    "tpu.trace_stop"() : () -> ()
    %cst_73 = arith.constant 0.353553385 : f32
    %216 = vector.broadcast %cst_73 : f32 to vector<4x8x8xf32>
    %217 = arith.mulf %215, %216 : vector<4x8x8xf32>
    %218 = vector.shape_cast %40 : vector<1x8xf32> to vector<1x1x8xf32>
    %219 = vector.broadcast %218 : vector<1x1x8xf32> to vector<4x8x8xf32>
    %220 = arith.addf %217, %219 : vector<4x8x8xf32>
    %cst_74 = arith.constant dense<0xFF800000> : vector<4x8xf32>
    %221 = vector.multi_reduction <maximumf>, %220, %cst_74 [2] : vector<4x8x8xf32> to vector<4x8xf32>
    %222 = vector.shape_cast %221 : vector<4x8xf32> to vector<4x8x1xf32>
    %223 = vector.broadcast %222 : vector<4x8x1xf32> to vector<4x8x8xf32>
    %224 = arith.subf %220, %223 : vector<4x8x8xf32>
    %225 = math.exp %224 : vector<4x8x8xf32>
    %cst_75 = arith.constant dense<0.000000e+00> : vector<4x8xf32>
    %226 = vector.multi_reduction <add>, %225, %cst_75 [2] : vector<4x8x8xf32> to vector<4x8xf32>
    %227 = vector.shape_cast %226 : vector<4x8xf32> to vector<4x8x1xf32>
    %228 = vector.broadcast %227 : vector<4x8x1xf32> to vector<4x8x8xf32>
    %229 = arith.divf %225, %228 : vector<4x8x8xf32>
    "tpu.trace_start"() <{level = 10 : i32, message = "nst,ntd->nsd"}> : () -> ()
    %cst_76 = arith.constant dense<0.000000e+00> : vector<4x8x8xf32>
    %230 = tpu.matmul %229, %214, %cst_76 {dimension_numbers = #tpu.dot_dimension_numbers<[2], [1], [1], [2], [0, 0, 0, 1, 1, 2], [0], [0]>} : vector<4x8x8xf32>, vector<4x8x8xf32>, vector<4x8x8xf32> -> vector<4x8x8xf32>
    "tpu.trace_stop"() : () -> ()
    %231 = vector.extract_strided_slice %230 {offsets = [0, 0, 0], sizes = [1, 8, 8], strides = [1, 1, 1]} : vector<4x8x8xf32> to vector<1x8x8xf32>
    %232 = vector.shape_cast %231 : vector<1x8x8xf32> to vector<8x8xf32>
    %233 = vector.extract_strided_slice %230 {offsets = [1, 0, 0], sizes = [1, 8, 8], strides = [1, 1, 1]} : vector<4x8x8xf32> to vector<1x8x8xf32>
    %234 = vector.shape_cast %233 : vector<1x8x8xf32> to vector<8x8xf32>
    %235 = vector.extract_strided_slice %230 {offsets = [2, 0, 0], sizes = [1, 8, 8], strides = [1, 1, 1]} : vector<4x8x8xf32> to vector<1x8x8xf32>
    %236 = vector.shape_cast %235 : vector<1x8x8xf32> to vector<8x8xf32>
    %237 = vector.extract_strided_slice %230 {offsets = [3, 0, 0], sizes = [1, 8, 8], strides = [1, 1, 1]} : vector<4x8x8xf32> to vector<1x8x8xf32>
    %238 = vector.shape_cast %237 : vector<1x8x8xf32> to vector<8x8xf32>
    %239 = tpu.concatenate %232, %234, %236, %238 in 1 : vector<8x8xf32>, vector<8x8xf32>, vector<8x8xf32>, vector<8x8xf32> -> vector<8x32xf32>
    %c1_77 = arith.constant 1 : index
    %c0_78 = arith.constant 0 : index
    %c0_79 = arith.constant 0 : index
    %240 = vector.load %arg8[%c1_77, %c0_78, %c0_79] : memref<2x32x32xf32, #tpu.memory_space<vmem>>, vector<1x32x32xf32>
    %241 = vector.shape_cast %240 : vector<1x32x32xf32> to vector<32x32xf32>
    %cst_80 = arith.constant dense<0.000000e+00> : vector<8x32xf32>
    %242 = tpu.matmul %239, %241, %cst_80 {dimension_numbers = #tpu.dot_dimension_numbers<[1], [0], [0], [1], [0, 0, 1, 1], [], []>} : vector<8x32xf32>, vector<32x32xf32>, vector<8x32xf32> -> vector<8x32xf32>
    %243 = vector.extract_strided_slice %180 {offsets = [0, 0], sizes = [1, 32], strides = [1, 1]} : vector<6x32xf32> to vector<1x32xf32>
    %244 = vector.broadcast %243 : vector<1x32xf32> to vector<8x32xf32>
    %245 = arith.addf %242, %244 : vector<8x32xf32>
    %246 = arith.addf %245, %178 : vector<8x32xf32>
    %247 = vector.extract_strided_slice %180 {offsets = [1, 0], sizes = [1, 32], strides = [1, 1]} : vector<6x32xf32> to vector<1x32xf32>
    %248 = vector.extract_strided_slice %180 {offsets = [2, 0], sizes = [1, 32], strides = [1, 1]} : vector<6x32xf32> to vector<1x32xf32>
    %cst_81 = arith.constant dense<0.000000e+00> : vector<8xf32>
    %249 = vector.multi_reduction <add>, %246, %cst_81 [1] : vector<8x32xf32> to vector<8xf32>
    %250 = vector.shape_cast %249 : vector<8xf32> to vector<8x1xf32>
    %cst_82 = arith.constant 3.200000e+01 : f32
    %251 = vector.broadcast %cst_82 : f32 to vector<8x1xf32>
    %252 = arith.divf %250, %251 : vector<8x1xf32>
    %253 = vector.broadcast %252 : vector<8x1xf32> to vector<8x32xf32>
    %254 = arith.subf %246, %253 : vector<8x32xf32>
    %255 = arith.mulf %254, %254 : vector<8x32xf32>
    %cst_83 = arith.constant dense<0.000000e+00> : vector<8xf32>
    %256 = vector.multi_reduction <add>, %255, %cst_83 [1] : vector<8x32xf32> to vector<8xf32>
    %257 = vector.shape_cast %256 : vector<8xf32> to vector<8x1xf32>
    %cst_84 = arith.constant 3.200000e+01 : f32
    %258 = vector.broadcast %cst_84 : f32 to vector<8x1xf32>
    %259 = arith.divf %257, %258 : vector<8x1xf32>
    %260 = vector.broadcast %252 : vector<8x1xf32> to vector<8x32xf32>
    %261 = arith.subf %246, %260 : vector<8x32xf32>
    %cst_85 = arith.constant 9.99999996E-13 : f32
    %262 = vector.broadcast %cst_85 : f32 to vector<8x1xf32>
    %263 = arith.addf %259, %262 : vector<8x1xf32>
    %264 = math.rsqrt %263 : vector<8x1xf32>
    %265 = vector.broadcast %264 : vector<8x1xf32> to vector<8x32xf32>
    %266 = arith.mulf %261, %265 : vector<8x32xf32>
    %267 = vector.broadcast %247 : vector<1x32xf32> to vector<8x32xf32>
    %268 = arith.mulf %266, %267 : vector<8x32xf32>
    %269 = vector.broadcast %248 : vector<1x32xf32> to vector<8x32xf32>
    %270 = arith.addf %268, %269 : vector<8x32xf32>
    %c1_86 = arith.constant 1 : index
    %c0_87 = arith.constant 0 : index
    %c0_88 = arith.constant 0 : index
    %271 = vector.load %arg10[%c1_86, %c0_87, %c0_88] : memref<2x32x64xf32, #tpu.memory_space<vmem>>, vector<1x32x64xf32>
    %272 = vector.shape_cast %271 : vector<1x32x64xf32> to vector<32x64xf32>
    %cst_89 = arith.constant dense<0.000000e+00> : vector<8x64xf32>
    %273 = tpu.matmul %270, %272, %cst_89 {dimension_numbers = #tpu.dot_dimension_numbers<[1], [0], [0], [1], [0, 0, 1, 1], [], []>} : vector<8x32xf32>, vector<32x64xf32>, vector<8x64xf32> -> vector<8x64xf32>
    %c1_90 = arith.constant 1 : index
    %c0_91 = arith.constant 0 : index
    %c0_92 = arith.constant 0 : index
    %274 = vector.load %arg11[%c1_90, %c0_91, %c0_92] : memref<2x1x64xf32, #tpu.memory_space<vmem>>, vector<1x1x64xf32>
    %275 = vector.shape_cast %274 : vector<1x1x64xf32> to vector<1x64xf32>
    %276 = vector.broadcast %275 : vector<1x64xf32> to vector<8x64xf32>
    %277 = arith.addf %273, %276 : vector<8x64xf32>
    %cst_93 = arith.constant 5.000000e-01 : f32
    %278 = vector.broadcast %cst_93 : f32 to vector<8x64xf32>
    %279 = arith.mulf %278, %277 : vector<8x64xf32>
    %cst_94 = arith.constant 0.707106769 : f32
    %280 = vector.broadcast %cst_94 : f32 to vector<8x64xf32>
    %281 = arith.mulf %277, %280 : vector<8x64xf32>
    %282 = math.erf %281 : vector<8x64xf32>
    %cst_95 = arith.constant 1.000000e+00 : f32
    %283 = vector.broadcast %cst_95 : f32 to vector<8x64xf32>
    %284 = arith.addf %283, %282 : vector<8x64xf32>
    %285 = arith.mulf %279, %284 : vector<8x64xf32>
    %c1_96 = arith.constant 1 : index
    %c0_97 = arith.constant 0 : index
    %c0_98 = arith.constant 0 : index
    %286 = vector.load %arg12[%c1_96, %c0_97, %c0_98] : memref<2x64x32xf32, #tpu.memory_space<vmem>>, vector<1x64x32xf32>
    %287 = vector.shape_cast %286 : vector<1x64x32xf32> to vector<64x32xf32>
    %cst_99 = arith.constant dense<0.000000e+00> : vector<8x32xf32>
    %288 = tpu.matmul %285, %287, %cst_99 {dimension_numbers = #tpu.dot_dimension_numbers<[1], [0], [0], [1], [0, 0, 1, 1], [], []>} : vector<8x64xf32>, vector<64x32xf32>, vector<8x32xf32> -> vector<8x32xf32>
    %289 = vector.extract_strided_slice %180 {offsets = [3, 0], sizes = [1, 32], strides = [1, 1]} : vector<6x32xf32> to vector<1x32xf32>
    %290 = vector.broadcast %289 : vector<1x32xf32> to vector<8x32xf32>
    %291 = arith.addf %288, %290 : vector<8x32xf32>
    %292 = arith.addf %291, %270 : vector<8x32xf32>
    %293 = vector.extract_strided_slice %180 {offsets = [4, 0], sizes = [1, 32], strides = [1, 1]} : vector<6x32xf32> to vector<1x32xf32>
    %294 = vector.extract_strided_slice %180 {offsets = [5, 0], sizes = [1, 32], strides = [1, 1]} : vector<6x32xf32> to vector<1x32xf32>
    %cst_100 = arith.constant dense<0.000000e+00> : vector<8xf32>
    %295 = vector.multi_reduction <add>, %292, %cst_100 [1] : vector<8x32xf32> to vector<8xf32>
    %296 = vector.shape_cast %295 : vector<8xf32> to vector<8x1xf32>
    %cst_101 = arith.constant 3.200000e+01 : f32
    %297 = vector.broadcast %cst_101 : f32 to vector<8x1xf32>
    %298 = arith.divf %296, %297 : vector<8x1xf32>
    %299 = vector.broadcast %298 : vector<8x1xf32> to vector<8x32xf32>
    %300 = arith.subf %292, %299 : vector<8x32xf32>
    %301 = arith.mulf %300, %300 : vector<8x32xf32>
    %cst_102 = arith.constant dense<0.000000e+00> : vector<8xf32>
    %302 = vector.multi_reduction <add>, %301, %cst_102 [1] : vector<8x32xf32> to vector<8xf32>
    %303 = vector.shape_cast %302 : vector<8xf32> to vector<8x1xf32>
    %cst_103 = arith.constant 3.200000e+01 : f32
    %304 = vector.broadcast %cst_103 : f32 to vector<8x1xf32>
    %305 = arith.divf %303, %304 : vector<8x1xf32>
    %306 = vector.broadcast %298 : vector<8x1xf32> to vector<8x32xf32>
    %307 = arith.subf %292, %306 : vector<8x32xf32>
    %cst_104 = arith.constant 9.99999996E-13 : f32
    %308 = vector.broadcast %cst_104 : f32 to vector<8x1xf32>
    %309 = arith.addf %305, %308 : vector<8x1xf32>
    %310 = math.rsqrt %309 : vector<8x1xf32>
    %311 = vector.broadcast %310 : vector<8x1xf32> to vector<8x32xf32>
    %312 = arith.mulf %307, %311 : vector<8x32xf32>
    %313 = vector.broadcast %293 : vector<1x32xf32> to vector<8x32xf32>
    %314 = arith.mulf %312, %313 : vector<8x32xf32>
    %315 = vector.broadcast %294 : vector<1x32xf32> to vector<8x32xf32>
    %316 = arith.addf %314, %315 : vector<8x32xf32>
    %317 = vector.extract_strided_slice %316 {offsets = [0, 0], sizes = [1, 32], strides = [1, 1]} : vector<8x32xf32> to vector<1x32xf32>
    %c0_105 = arith.constant 0 : index
    %c0_106 = arith.constant 0 : index
    %318 = vector.load %arg13[%c0_105, %c0_106] : memref<32x32xf32, #tpu.memory_space<vmem>>, vector<32x32xf32>
    %cst_107 = arith.constant dense<0.000000e+00> : vector<1x32xf32>
    %319 = tpu.matmul %317, %318, %cst_107 {dimension_numbers = #tpu.dot_dimension_numbers<[1], [0], [0], [1], [0, 0, 1, 1], [], []>} : vector<1x32xf32>, vector<32x32xf32>, vector<1x32xf32> -> vector<1x32xf32>
    %c0_108 = arith.constant 0 : index
    %c0_109 = arith.constant 0 : index
    %320 = vector.load %arg14[%c0_108, %c0_109] : memref<1x32xf32, #tpu.memory_space<vmem>>, vector<1x32xf32>
    %321 = arith.addf %319, %320 : vector<1x32xf32>
    %322 = math.tanh %321 : vector<1x32xf32>
    %c0_110 = arith.constant 0 : index
    %c0_111 = arith.constant 0 : index
    %323 = vector.load %arg15[%c0_110, %c0_111] : memref<32x1xf32, #tpu.memory_space<vmem>>, vector<32x1xf32>
    %cst_112 = arith.constant dense<0.000000e+00> : vector<1x1xf32>
    %324 = tpu.matmul %322, %323, %cst_112 {dimension_numbers = #tpu.dot_dimension_numbers<[1], [0], [0], [1], [0, 0, 1, 1], [], []>} : vector<1x32xf32>, vector<32x1xf32>, vector<1x1xf32> -> vector<1x1xf32>
    %c0_113 = arith.constant 0 : index
    %c0_114 = arith.constant 0 : index
    %325 = vector.load %arg16[%c0_113, %c0_114] : memref<1x1xf32, #tpu.memory_space<vmem>>, vector<1x1xf32>
    %326 = arith.addf %324, %325 : vector<1x1xf32>
    %c0_115 = arith.constant 0 : index
    %c0_116 = arith.constant 0 : index
    %c0_117 = arith.constant 0 : index
    %327 = vector.load %arg17[%c0_115, %c0_116, %c0_117] : memref<1x1x1xf32, #tpu.memory_space<vmem>>, vector<1x1x1xf32>
    %328 = vector.shape_cast %327 : vector<1x1x1xf32> to vector<1x1xf32>
    %329 = vector.shape_cast %326 : vector<1x1xf32> to vector<1x1x1xf32>
    tpu.vector_store %arg17[%c0_115, %c0_116, %c0_117], %329 {strides = array<i32>} : memref<1x1x1xf32, #tpu.memory_space<vmem>>, vector<1x1x1xf32>,
    return
  }
  func.func @transform_0(%arg0: i32) -> (i32, i32, i32) {
    %c0_i32 = arith.constant 0 : i32
    %c0_i32_0 = arith.constant 0 : i32
    %c0_i32_1 = arith.constant 0 : i32
    return %arg0, %c0_i32, %c0_i32_0 : i32, i32, i32
  }
  func.func @transform_1(%arg0: i32) -> (i32, i32, i32) {
    %c0_i32 = arith.constant 0 : i32
    %c0_i32_0 = arith.constant 0 : i32
    %c0_i32_1 = arith.constant 0 : i32
    return %arg0, %c0_i32, %c0_i32_0 : i32, i32, i32
  }
  func.func @transform_2(%arg0: i32) -> (i32, i32) {
    %c0_i32 = arith.constant 0 : i32
    %c0_i32_0 = arith.constant 0 : i32
    %c0_i32_1 = arith.constant 0 : i32
    return %c0_i32, %c0_i32_0 : i32, i32
  }
  func.func @transform_3(%arg0: i32) -> (i32, i32) {
    %c0_i32 = arith.constant 0 : i32
    %c0_i32_0 = arith.constant 0 : i32
    %c0_i32_1 = arith.constant 0 : i32
    return %c0_i32, %c0_i32_0 : i32, i32
  }
  func.func @transform_4(%arg0: i32) -> (i32, i32) {
    %c0_i32 = arith.constant 0 : i32
    %c0_i32_0 = arith.constant 0 : i32
    %c0_i32_1 = arith.constant 0 : i32
    return %c0_i32, %c0_i32_0 : i32, i32
  }
  func.func @transform_5(%arg0: i32) -> (i32, i32, i32) {
    %c0_i32 = arith.constant 0 : i32
    %c0_i32_0 = arith.constant 0 : i32
    %c0_i32_1 = arith.constant 0 : i32
    %c0_i32_2 = arith.constant 0 : i32
    return %c0_i32, %c0_i32_0, %c0_i32_1 : i32, i32, i32
  }
  func.func @transform_6(%arg0: i32) -> (i32, i32, i32) {
    %c0_i32 = arith.constant 0 : i32
    %c0_i32_0 = arith.constant 0 : i32
    %c0_i32_1 = arith.constant 0 : i32
    %c0_i32_2 = arith.constant 0 : i32
    return %c0_i32, %c0_i32_0, %c0_i32_1 : i32, i32, i32
  }
  func.func @transform_7(%arg0: i32) -> (i32, i32, i32) {
    %c0_i32 = arith.constant 0 : i32
    %c0_i32_0 = arith.constant 0 : i32
    %c0_i32_1 = arith.constant 0 : i32
    %c0_i32_2 = arith.constant 0 : i32
    return %c0_i32, %c0_i32_0, %c0_i32_1 : i32, i32, i32
  }
  func.func @transform_8(%arg0: i32) -> (i32, i32, i32) {
    %c0_i32 = arith.constant 0 : i32
    %c0_i32_0 = arith.constant 0 : i32
    %c0_i32_1 = arith.constant 0 : i32
    %c0_i32_2 = arith.constant 0 : i32
    return %c0_i32, %c0_i32_0, %c0_i32_1 : i32, i32, i32
  }
  func.func @transform_9(%arg0: i32) -> (i32, i32, i32) {
    %c0_i32 = arith.constant 0 : i32
    %c0_i32_0 = arith.constant 0 : i32
    %c0_i32_1 = arith.constant 0 : i32
    %c0_i32_2 = arith.constant 0 : i32
    return %c0_i32, %c0_i32_0, %c0_i32_1 : i32, i32, i32
  }
  func.func @transform_10(%arg0: i32) -> (i32, i32, i32) {
    %c0_i32 = arith.constant 0 : i32
    %c0_i32_0 = arith.constant 0 : i32
    %c0_i32_1 = arith.constant 0 : i32
    %c0_i32_2 = arith.constant 0 : i32
    return %c0_i32, %c0_i32_0, %c0_i32_1 : i32, i32, i32
  }
  func.func @transform_11(%arg0: i32) -> (i32, i32, i32) {
    %c0_i32 = arith.constant 0 : i32
    %c0_i32_0 = arith.constant 0 : i32
    %c0_i32_1 = arith.constant 0 : i32
    %c0_i32_2 = arith.constant 0 : i32
    return %c0_i32, %c0_i32_0, %c0_i32_1 : i32, i32, i32
  }
  func.func @transform_12(%arg0: i32) -> (i32, i32) {
    %c0_i32 = arith.constant 0 : i32
    %c0_i32_0 = arith.constant 0 : i32
    %c0_i32_1 = arith.constant 0 : i32
    return %c0_i32, %c0_i32_0 : i32, i32
  }
  func.func @transform_13(%arg0: i32) -> (i32, i32) {
    %c0_i32 = arith.constant 0 : i32
    %c0_i32_0 = arith.constant 0 : i32
    %c0_i32_1 = arith.constant 0 : i32
    return %c0_i32, %c0_i32_0 : i32, i32
  }
  func.func @transform_14(%arg0: i32) -> (i32, i32) {
    %c0_i32 = arith.constant 0 : i32
    %c0_i32_0 = arith.constant 0 : i32
    %c0_i32_1 = arith.constant 0 : i32
    return %c0_i32, %c0_i32_0 : i32, i32
  }
  func.func @transform_15(%arg0: i32) -> (i32, i32) {
    %c0_i32 = arith.constant 0 : i32
    %c0_i32_0 = arith.constant 0 : i32
    %c0_i32_1 = arith.constant 0 : i32
    return %c0_i32, %c0_i32_0 : i32, i32
  }
  func.func @transform_16(%arg0: i32) -> (i32, i32, i32) {
    %c0_i32 = arith.constant 0 : i32
    %c0_i32_0 = arith.constant 0 : i32
    %c0_i32_1 = arith.constant 0 : i32
    return %arg0, %c0_i32, %c0_i32_0 : i32, i32, i32
  }
}

</mosaic_0001>

<llo_original>
// kernel: tpu_custom_call.1
$region0: #{tpu_custom_call.1}
  #allocation0 [shape = 'u32[]', space=smem, size = 0x4, offset = 0x4, fixed_abs, tag = 'smem constant byte address 0x4 - core index']
  #allocation1 [shape = 'u32[72,128]{1,0:T(1,128)}', space=vmem, size = 0x9000, scoped, tag = 'internal scratch']
  #allocation2 [shape = 'f32[1,1]{1,0:T(1,128)S(1)}', space=vmem, size = 0x200, scoped, tag = 'scoped memory for tpu_custom_call.1']
  %s0 = inlined_call_operand.vmem [shape: s32[2,8,1], index: 0, kind: input, shape index: {}]
  %s1 = inlined_call_operand.vmem [shape: f32[2,1,8], index: 1, kind: input, shape index: {}]
  %s2 = inlined_call_operand.vmem [shape: f32[64,32], index: 2, kind: input, shape index: {}]
  %s3 = inlined_call_operand.vmem [shape: f32[8,32], index: 3, kind: input, shape index: {}]
  %s4 = inlined_call_operand.vmem [shape: f32[2,32], index: 4, kind: input, shape index: {}]
  %s5 = inlined_call_operand.vmem [shape: f32[2,32,96], index: 5, kind: input, shape index: {}]
  %s6 = inlined_call_operand.vmem [shape: f32[2,1,96], index: 6, kind: input, shape index: {}]
  %s7 = inlined_call_operand.vmem [shape: f32[2,32,32], index: 7, kind: input, shape index: {}]
  %s8 = inlined_call_operand.vmem [shape: f32[2,6,32], index: 8, kind: input, shape index: {}]
  %s9 = inlined_call_operand.vmem [shape: f32[2,32,64], index: 9, kind: input, shape index: {}]
  %s10 = inlined_call_operand.vmem [shape: f32[2,1,64], index: 10, kind: input, shape index: {}]
  %s11 = inlined_call_operand.vmem [shape: f32[2,64,32], index: 11, kind: input, shape index: {}]
  %s12 = inlined_call_operand.vmem [shape: f32[32,32], index: 12, kind: input, shape index: {}]
  %s13 = inlined_call_operand.vmem [shape: f32[1,32], index: 13, kind: input, shape index: {}]
  %s14 = inlined_call_operand.vmem [shape: f32[32,1], index: 14, kind: input, shape index: {}]
  %s15 = inlined_call_operand.<no memory space> [shape: f32[1,1], index: 15, kind: input, shape index: {}]
  %s16 = inlined_call_operand.vmem [shape: f32[2,1,1], index: 16, kind: output, shape index: {}]
  %s17 = sld [smem:[#allocation0]]
  $region97: #{tpu_custom_call.1} parent=0
    _
  %s19 = ssub.s32 1, %s17
  %s20 = scalar_select 0, %s19, %s17
  %v21 = vstv %s15
  %22 = vst [vmem:[#allocation2] sm:$0x1] %v21
  loop: start=0, step=1, limit=4
  $region2: #{tpu_custom_call.1} parent=0 // loop_pre_header
    _
  $region3: #{tpu_custom_call.1} parent=0 // loop_header
    %s24 = sphi 0, %s28
    %p25 = scmp.ge.s32.totalorder %s24, 4
    %s34 = sphi 0, %s36
    %s37 = sphi 0, %s34
    %s38 = sphi 0, %s37
    %s54 = sphi 0, %s38
    %s60 = sphi 0, %s62
    %s63 = sphi 0, %s60
    %s64 = sphi 0, %s63
    %s80 = sphi 0, %s64
    %s84 = sphi 0, %s84
    %s86 = sphi 0, %s84
    %s87 = sphi 0, %s86
    %s101 = sphi 0, %s87
    %s105 = sphi 0, %s105
    %s107 = sphi 0, %s105
    %s108 = sphi 0, %s107
    %s122 = sphi 0, %s108
    %s126 = sphi 0, %s126
    %s128 = sphi 0, %s126
    %s129 = sphi 0, %s128
    %s143 = sphi 0, %s129
    %s147 = sphi 0, %s147
    %s149 = sphi 0, %s147
    %s150 = sphi 0, %s149
    %s164 = sphi 0, %s150
    %s168 = sphi 0, %s168
    %s170 = sphi 0, %s168
    %s171 = sphi 0, %s170
    %s185 = sphi 0, %s171
    %s189 = sphi 0, %s189
    %s191 = sphi 0, %s189
    %s192 = sphi 0, %s191
    %s206 = sphi 0, %s192
    %s210 = sphi 0, %s210
    %s212 = sphi 0, %s210
    %s213 = sphi 0, %s212
    %s227 = sphi 0, %s213
    %s231 = sphi 0, %s231
    %s233 = sphi 0, %s231
    %s234 = sphi 0, %s233
    %s248 = sphi 0, %s234
    %s252 = sphi 0, %s252
    %s254 = sphi 0, %s252
    %s255 = sphi 0, %s254
    %s269 = sphi 0, %s255
    %s273 = sphi 0, %s273
    %s275 = sphi 0, %s273
    %s276 = sphi 0, %s275
    %s290 = sphi 0, %s276
    %s294 = sphi 0, %s294
    %s296 = sphi 0, %s294
    %s297 = sphi 0, %s296
    %s311 = sphi 0, %s297
    %s315 = sphi 0, %s315
    %s317 = sphi 0, %s315
    %s318 = sphi 0, %s317
    %s332 = sphi 0, %s318
    %s336 = sphi 0, %s336
    %s338 = sphi 0, %s336
    %s339 = sphi 0, %s338
    %s353 = sphi 0, %s339
    %s357 = sphi 0, %s357
    %s359 = sphi 0, %s357
    %s360 = sphi 0, %s359
    %s374 = sphi 0, %s360
    %s380 = sphi 0, %s382
    %s383 = sphi 0, %s380
    %s384 = sphi 0, %s383
    %s400 = sphi 0, %s384
  $region4: #{tpu_custom_call.1} parent=0 // loop_header_branch
    %27 = sbr.rel (%p25) target = $region8
  $region5: #{tpu_custom_call.1} parent=0 // loop_body
    %s29 = ssub.s32 %s24, 1
    %s30 = ssub.s32 %s24, 2
    %s31 = sadd.s32 %s24, 1
    %s32 = ssub.s32 %s24, %s31
    %p33 = scmp.eq.s32.totalorder %s32, 0
    %s35 = sadd.s32 %s34, 1
    %s36 = scalar_select %p33, %s34, %s35
    %p39 = pneg %p33
    %p40 = scmp.eq.s32.totalorder %s24, 1
    %p41 = por %p39, %p40
    %p42 = scmp.ne.s32.totalorder %s34, %s37
    %p43 = scmp.eq.s32.totalorder %s24, 0
    %p44 = por %p42, %p43
    %p45 = scmp.ne.s32.totalorder %s34, %s37
    %p46 = scmp.eq.s32.totalorder %s29, 1
    %p47 = por %p45, %p46
    %p48 = scmp.ne.s32.totalorder %s37, %s38
    %p49 = scmp.eq.s32.totalorder %s29, 0
    %p50 = por %p48, %p49
    %p51 = scmp.ne.s32.totalorder %s37, %s38
    %p52 = scmp.eq.s32.totalorder %s30, 1
    %p53 = por %p51, %p52
    %p55 = scmp.ne.s32.totalorder %s38, %s54
    %p56 = scmp.eq.s32.totalorder %s30, 0
    %p57 = por %p55, %p56
    %s58 = ssub.s32 %s24, %s31
    %p59 = scmp.eq.s32.totalorder %s58, 0
    %s61 = sadd.s32 %s60, 1
    %s62 = scalar_select %p59, %s60, %s61
    %p65 = pneg %p59
    %p66 = scmp.eq.s32.totalorder %s24, 1
    %p67 = por %p65, %p66
    %p68 = scmp.ne.s32.totalorder %s60, %s63
    %p69 = scmp.eq.s32.totalorder %s24, 0
    %p70 = por %p68, %p69
    %p71 = scmp.ne.s32.totalorder %s60, %s63
    %p72 = scmp.eq.s32.totalorder %s29, 1
    %p73 = por %p71, %p72
    %p74 = scmp.ne.s32.totalorder %s63, %s64
    %p75 = scmp.eq.s32.totalorder %s29, 0
    %p76 = por %p74, %p75
    %p77 = scmp.ne.s32.totalorder %s63, %s64
    %p78 = scmp.eq.s32.totalorder %s30, 1
    %p79 = por %p77, %p78
    %p81 = scmp.ne.s32.totalorder %s64, %s80
    %p82 = scmp.eq.s32.totalorder %s30, 0
    %p83 = por %p81, %p82
    %s85 = sadd.s32 %s84, 1
    %p88 = scmp.eq.s32.totalorder %s24, 1
    %p89 = scmp.ne.s32.totalorder %s84, %s86
    %p90 = scmp.eq.s32.totalorder %s24, 0
    %p91 = por %p89, %p90
    %p92 = scmp.ne.s32.totalorder %s84, %s86
    %p93 = scmp.eq.s32.totalorder %s29, 1
    %p94 = por %p92, %p93
    %p95 = scmp.ne.s32.totalorder %s86, %s87
    %p96 = scmp.eq.s32.totalorder %s29, 0
    %p97 = por %p95, %p96
    %p98 = scmp.ne.s32.totalorder %s86, %s87
    %p99 = scmp.eq.s32.totalorder %s30, 1
    %p100 = por %p98, %p99
    %p102 = scmp.ne.s32.totalorder %s87, %s101
    %p103 = scmp.eq.s32.totalorder %s30, 0
    %p104 = por %p102, %p103
    %s106 = sadd.s32 %s105, 1
    %p109 = scmp.eq.s32.totalorder %s24, 1
    %p110 = scmp.ne.s32.totalorder %s105, %s107
    %p111 = scmp.eq.s32.totalorder %s24, 0
    %p112 = por %p110, %p111
    %p113 = scmp.ne.s32.totalorder %s105, %s107
    %p114 = scmp.eq.s32.totalorder %s29, 1
    %p115 = por %p113, %p114
    %p116 = scmp.ne.s32.totalorder %s107, %s108
    %p117 = scmp.eq.s32.totalorder %s29, 0
    %p118 = por %p116, %p117
    %p119 = scmp.ne.s32.totalorder %s107, %s108
    %p120 = scmp.eq.s32.totalorder %s30, 1
    %p121 = por %p119, %p120
    %p123 = scmp.ne.s32.totalorder %s108, %s122
    %p124 = scmp.eq.s32.totalorder %s30, 0
    %p125 = por %p123, %p124
    %s127 = sadd.s32 %s126, 1
    %p130 = scmp.eq.s32.totalorder %s24, 1
    %p131 = scmp.ne.s32.totalorder %s126, %s128
    %p132 = scmp.eq.s32.totalorder %s24, 0
    %p133 = por %p131, %p132
    %p134 = scmp.ne.s32.totalorder %s126, %s128
    %p135 = scmp.eq.s32.totalorder %s29, 1
    %p136 = por %p134, %p135
    %p137 = scmp.ne.s32.totalorder %s128, %s129
    %p138 = scmp.eq.s32.totalorder %s29, 0
    %p139 = por %p137, %p138
    %p140 = scmp.ne.s32.totalorder %s128, %s129
    %p141 = scmp.eq.s32.totalorder %s30, 1
    %p142 = por %p140, %p141
    %p144 = scmp.ne.s32.totalorder %s129, %s143
    %p145 = scmp.eq.s32.totalorder %s30, 0
    %p146 = por %p144, %p145
    %s148 = sadd.s32 %s147, 1
    %p151 = scmp.eq.s32.totalorder %s24, 1
    %p152 = scmp.ne.s32.totalorder %s147, %s149
    %p153 = scmp.eq.s32.totalorder %s24, 0
    %p154 = por %p152, %p153
    %p155 = scmp.ne.s32.totalorder %s147, %s149
    %p156 = scmp.eq.s32.totalorder %s29, 1
    %p157 = por %p155, %p156
    %p158 = scmp.ne.s32.totalorder %s149, %s150
    %p159 = scmp.eq.s32.totalorder %s29, 0
    %p160 = por %p158, %p159
    %p161 = scmp.ne.s32.totalorder %s149, %s150
    %p162 = scmp.eq.s32.totalorder %s30, 1
    %p163 = por %p161, %p162
    %p165 = scmp.ne.s32.totalorder %s150, %s164
    %p166 = scmp.eq.s32.totalorder %s30, 0
    %p167 = por %p165, %p166
    %s169 = sadd.s32 %s168, 1
    %p172 = scmp.eq.s32.totalorder %s24, 1
    %p173 = scmp.ne.s32.totalorder %s168, %s170
    %p174 = scmp.eq.s32.totalorder %s24, 0
    %p175 = por %p173, %p174
    %p176 = scmp.ne.s32.totalorder %s168, %s170
    %p177 = scmp.eq.s32.totalorder %s29, 1
    %p178 = por %p176, %p177
    %p179 = scmp.ne.s32.totalorder %s170, %s171
    %p180 = scmp.eq.s32.totalorder %s29, 0
    %p181 = por %p179, %p180
    %p182 = scmp.ne.s32.totalorder %s170, %s171
    %p183 = scmp.eq.s32.totalorder %s30, 1
    %p184 = por %p182, %p183
    %p186 = scmp.ne.s32.totalorder %s171, %s185
    %p187 = scmp.eq.s32.totalorder %s30, 0
    %p188 = por %p186, %p187
    %s190 = sadd.s32 %s189, 1
    %p193 = scmp.eq.s32.totalorder %s24, 1
    %p194 = scmp.ne.s32.totalorder %s189, %s191
    %p195 = scmp.eq.s32.totalorder %s24, 0
    %p196 = por %p194, %p195
    %p197 = scmp.ne.s32.totalorder %s189, %s191
    %p198 = scmp.eq.s32.totalorder %s29, 1
    %p199 = por %p197, %p198
    %p200 = scmp.ne.s32.totalorder %s191, %s192
    %p201 = scmp.eq.s32.totalorder %s29, 0
    %p202 = por %p200, %p201
    %p203 = scmp.ne.s32.totalorder %s191, %s192
    %p204 = scmp.eq.s32.totalorder %s30, 1
    %p205 = por %p203, %p204
    %p207 = scmp.ne.s32.totalorder %s192, %s206
    %p208 = scmp.eq.s32.totalorder %s30, 0
    %p209 = por %p207, %p208
    %s211 = sadd.s32 %s210, 1
    %p214 = scmp.eq.s32.totalorder %s24, 1
    %p215 = scmp.ne.s32.totalorder %s210, %s212
    %p216 = scmp.eq.s32.totalorder %s24, 0
    %p217 = por %p215, %p216
    %p218 = scmp.ne.s32.totalorder %s210, %s212
    %p219 = scmp.eq.s32.totalorder %s29, 1
    %p220 = por %p218, %p219
    %p221 = scmp.ne.s32.totalorder %s212, %s213
    %p222 = scmp.eq.s32.totalorder %s29, 0
    %p223 = por %p221, %p222
    %p224 = scmp.ne.s32.totalorder %s212, %s213
    %p225 = scmp.eq.s32.totalorder %s30, 1
    %p226 = por %p224, %p225
    %p228 = scmp.ne.s32.totalorder %s213, %s227
    %p229 = scmp.eq.s32.totalorder %s30, 0
    %p230 = por %p228, %p229
    %s232 = sadd.s32 %s231, 1
    %p235 = scmp.eq.s32.totalorder %s24, 1
    %p236 = scmp.ne.s32.totalorder %s231, %s233
    %p237 = scmp.eq.s32.totalorder %s24, 0
    %p238 = por %p236, %p237
    %p239 = scmp.ne.s32.totalorder %s231, %s233
    %p240 = scmp.eq.s32.totalorder %s29, 1
    %p241 = por %p239, %p240
    %p242 = scmp.ne.s32.totalorder %s233, %s234
    %p243 = scmp.eq.s32.totalorder %s29, 0
    %p244 = por %p242, %p243
    %p245 = scmp.ne.s32.totalorder %s233, %s234
    %p246 = scmp.eq.s32.totalorder %s30, 1
    %p247 = por %p245, %p246
    %p249 = scmp.ne.s32.totalorder %s234, %s248
    %p250 = scmp.eq.s32.totalorder %s30, 0
    %p251 = por %p249, %p250
    %s253 = sadd.s32 %s252, 1
    %p256 = scmp.eq.s32.totalorder %s24, 1
    %p257 = scmp.ne.s32.totalorder %s252, %s254
    %p258 = scmp.eq.s32.totalorder %s24, 0
    %p259 = por %p257, %p258
    %p260 = scmp.ne.s32.totalorder %s252, %s254
    %p261 = scmp.eq.s32.totalorder %s29, 1
    %p262 = por %p260, %p261
    %p263 = scmp.ne.s32.totalorder %s254, %s255
    %p264 = scmp.eq.s32.totalorder %s29, 0
    %p265 = por %p263, %p264
    %p266 = scmp.ne.s32.totalorder %s254, %s255
    %p267 = scmp.eq.s32.totalorder %s30, 1
    %p268 = por %p266, %p267
    %p270 = scmp.ne.s32.totalorder %s255, %s269
    %p271 = scmp.eq.s32.totalorder %s30, 0
    %p272 = por %p270, %p271
    %s274 = sadd.s32 %s273, 1
    %p277 = scmp.eq.s32.totalorder %s24, 1
    %p278 = scmp.ne.s32.totalorder %s273, %s275
    %p279 = scmp.eq.s32.totalorder %s24, 0
    %p280 = por %p278, %p279
    %p281 = scmp.ne.s32.totalorder %s273, %s275
    %p282 = scmp.eq.s32.totalorder %s29, 1
    %p283 = por %p281, %p282
    %p284 = scmp.ne.s32.totalorder %s275, %s276
    %p285 = scmp.eq.s32.totalorder %s29, 0
    %p286 = por %p284, %p285
    %p287 = scmp.ne.s32.totalorder %s275, %s276
    %p288 = scmp.eq.s32.totalorder %s30, 1
    %p289 = por %p287, %p288
    %p291 = scmp.ne.s32.totalorder %s276, %s290
    %p292 = scmp.eq.s32.totalorder %s30, 0
    %p293 = por %p291, %p292
    %s295 = sadd.s32 %s294, 1
    %p298 = scmp.eq.s32.totalorder %s24, 1
    %p299 = scmp.ne.s32.totalorder %s294, %s296
    %p300 = scmp.eq.s32.totalorder %s24, 0
    %p301 = por %p299, %p300
    %p302 = scmp.ne.s32.totalorder %s294, %s296
    %p303 = scmp.eq.s32.totalorder %s29, 1
    %p304 = por %p302, %p303
    %p305 = scmp.ne.s32.totalorder %s296, %s297
    %p306 = scmp.eq.s32.totalorder %s29, 0
    %p307 = por %p305, %p306
    %p308 = scmp.ne.s32.totalorder %s296, %s297
    %p309 = scmp.eq.s32.totalorder %s30, 1
    %p310 = por %p308, %p309
    %p312 = scmp.ne.s32.totalorder %s297, %s311
    %p313 = scmp.eq.s32.totalorder %s30, 0
    %p314 = por %p312, %p313
    %s316 = sadd.s32 %s315, 1
    %p319 = scmp.eq.s32.totalorder %s24, 1
    %p320 = scmp.ne.s32.totalorder %s315, %s317
    %p321 = scmp.eq.s32.totalorder %s24, 0
    %p322 = por %p320, %p321
    %p323 = scmp.ne.s32.totalorder %s315, %s317
    %p324 = scmp.eq.s32.totalorder %s29, 1
    %p325 = por %p323, %p324
    %p326 = scmp.ne.s32.totalorder %s317, %s318
    %p327 = scmp.eq.s32.totalorder %s29, 0
    %p328 = por %p326, %p327
    %p329 = scmp.ne.s32.totalorder %s317, %s318
    %p330 = scmp.eq.s32.totalorder %s30, 1
    %p331 = por %p329, %p330
    %p333 = scmp.ne.s32.totalorder %s318, %s332
    %p334 = scmp.eq.s32.totalorder %s30, 0
    %p335 = por %p333, %p334
    %s337 = sadd.s32 %s336, 1
    %p340 = scmp.eq.s32.totalorder %s24, 1
    %p341 = scmp.ne.s32.totalorder %s336, %s338
    %p342 = scmp.eq.s32.totalorder %s24, 0
    %p343 = por %p341, %p342
    %p344 = scmp.ne.s32.totalorder %s336, %s338
    %p345 = scmp.eq.s32.totalorder %s29, 1
    %p346 = por %p344, %p345
    %p347 = scmp.ne.s32.totalorder %s338, %s339
    %p348 = scmp.eq.s32.totalorder %s29, 0
    %p349 = por %p347, %p348
    %p350 = scmp.ne.s32.totalorder %s338, %s339
    %p351 = scmp.eq.s32.totalorder %s30, 1
    %p352 = por %p350, %p351
    %p354 = scmp.ne.s32.totalorder %s339, %s353
    %p355 = scmp.eq.s32.totalorder %s30, 0
    %p356 = por %p354, %p355
    %s358 = sadd.s32 %s357, 1
    %p361 = scmp.eq.s32.totalorder %s24, 1
    %p362 = scmp.ne.s32.totalorder %s357, %s359
    %p363 = scmp.eq.s32.totalorder %s24, 0
    %p364 = por %p362, %p363
    %p365 = scmp.ne.s32.totalorder %s357, %s359
    %p366 = scmp.eq.s32.totalorder %s29, 1
    %p367 = por %p365, %p366
    %p368 = scmp.ne.s32.totalorder %s359, %s360
    %p369 = scmp.eq.s32.totalorder %s29, 0
    %p370 = por %p368, %p369
    %p371 = scmp.ne.s32.totalorder %s359, %s360
    %p372 = scmp.eq.s32.totalorder %s30, 1
    %p373 = por %p371, %p372
    %p375 = scmp.ne.s32.totalorder %s360, %s374
    %p376 = scmp.eq.s32.totalorder %s30, 0
    %p377 = por %p375, %p376
    %s378 = ssub.s32 %s24, %s31
    %p379 = scmp.eq.s32.totalorder %s378, 0
    %s381 = sadd.s32 %s380, 1
    %s382 = scalar_select %p379, %s380, %s381
    %p385 = pneg %p379
    %p386 = scmp.eq.s32.totalorder %s24, 1
    %p387 = por %p385, %p386
    %p388 = scmp.ne.s32.totalorder %s380, %s383
    %p389 = scmp.eq.s32.totalorder %s24, 0
    %p390 = por %p388, %p389
    %p391 = scmp.ne.s32.totalorder %s380, %s383
    %p392 = scmp.eq.s32.totalorder %s29, 1
    %p393 = por %p391, %p392
    %p394 = scmp.ne.s32.totalorder %s383, %s384
    %p395 = scmp.eq.s32.totalorder %s29, 0
    %p396 = por %p394, %p395
    %p397 = scmp.ne.s32.totalorder %s383, %s384
    %p398 = scmp.eq.s32.totalorder %s30, 1
    %p399 = por %p397, %p398
    %p401 = scmp.ne.s32.totalorder %s384, %s400
    %p402 = scmp.eq.s32.totalorder %s30, 0
    %p403 = por %p401, %p402
    %p404 = scmp.le.s32.totalorder 1, %s24
    %p405 = scmp.lt.s32.totalorder %s24, 3
    %p406 = pnand %p404, %p405
    %p407 = pneg %p406
    // Predicated region
    $region9: #{tpu_custom_call.1} parent=5 // pred_check
      _
    $region10: #{tpu_custom_call.1} parent=5 // pred_check_branch
      %409 = sbr.rel (%p406) target = $region12
    $region11: #{tpu_custom_call.1} parent=5 // pred_region
      %s410 = ssub.s32 %s24, 1
      // Predicated region
      $region13: #{tpu_custom_call.1} parent=11 // pred_check
        %p411 = pneg %p97
      $region14: #{tpu_custom_call.1} parent=11 // pred_check_branch
        %413 = sbr.rel (%p411) target = $region16
      $region15: #{tpu_custom_call.1} parent=11 // pred_region
        _
      $region16: #{tpu_custom_call.1} parent=11 // pred_fallthru
        _
      // Predicated region
      $region17: #{tpu_custom_call.1} parent=11 // pred_check
        %p414 = pneg %p118
      $region18: #{tpu_custom_call.1} parent=11 // pred_check_branch
        %416 = sbr.rel (%p414) target = $region20
      $region19: #{tpu_custom_call.1} parent=11 // pred_region
        _
      $region20: #{tpu_custom_call.1} parent=11 // pred_fallthru
        _
      // Predicated region
      $region21: #{tpu_custom_call.1} parent=11 // pred_check
        %p417 = pneg %p139
      $region22: #{tpu_custom_call.1} parent=11 // pred_check_branch
        %419 = sbr.rel (%p417) target = $region24
      $region23: #{tpu_custom_call.1} parent=11 // pred_region
        _
      $region24: #{tpu_custom_call.1} parent=11 // pred_fallthru
        _
      // Predicated region
      $region25: #{tpu_custom_call.1} parent=11 // pred_check
        %p420 = pneg %p160
      $region26: #{tpu_custom_call.1} parent=11 // pred_check_branch
        %422 = sbr.rel (%p420) target = $region28
      $region27: #{tpu_custom_call.1} parent=11 // pred_region
        _
      $region28: #{tpu_custom_call.1} parent=11 // pred_fallthru
        _
      // Predicated region
      $region29: #{tpu_custom_call.1} parent=11 // pred_check
        %p423 = pneg %p181
      $region30: #{tpu_custom_call.1} parent=11 // pred_check_branch
        %425 = sbr.rel (%p423) target = $region32
      $region31: #{tpu_custom_call.1} parent=11 // pred_region
        _
      $region32: #{tpu_custom_call.1} parent=11 // pred_fallthru
        _
      // Predicated region
      $region33: #{tpu_custom_call.1} parent=11 // pred_check
        %p426 = pneg %p202
      $region34: #{tpu_custom_call.1} parent=11 // pred_check_branch
        %428 = sbr.rel (%p426) target = $region36
      $region35: #{tpu_custom_call.1} parent=11 // pred_region
        _
      $region36: #{tpu_custom_call.1} parent=11 // pred_fallthru
        _
      // Predicated region
      $region37: #{tpu_custom_call.1} parent=11 // pred_check
        %p429 = pneg %p223
      $region38: #{tpu_custom_call.1} parent=11 // pred_check_branch
        %431 = sbr.rel (%p429) target = $region40
      $region39: #{tpu_custom_call.1} parent=11 // pred_region
        _
      $region40: #{tpu_custom_call.1} parent=11 // pred_fallthru
        _
      // Predicated region
      $region41: #{tpu_custom_call.1} parent=11 // pred_check
        %p432 = pneg %p244
      $region42: #{tpu_custom_call.1} parent=11 // pred_check_branch
        %434 = sbr.rel (%p432) target = $region44
      $region43: #{tpu_custom_call.1} parent=11 // pred_region
        _
      $region44: #{tpu_custom_call.1} parent=11 // pred_fallthru
        _
      // Predicated region
      $region45: #{tpu_custom_call.1} parent=11 // pred_check
        %p435 = pneg %p265
      $region46: #{tpu_custom_call.1} parent=11 // pred_check_branch
        %437 = sbr.rel (%p435) target = $region48
      $region47: #{tpu_custom_call.1} parent=11 // pred_region
        _
      $region48: #{tpu_custom_call.1} parent=11 // pred_fallthru
        _
      // Predicated region
      $region49: #{tpu_custom_call.1} parent=11 // pred_check
        %p438 = pneg %p286
      $region50: #{tpu_custom_call.1} parent=11 // pred_check_branch
        %440 = sbr.rel (%p438) target = $region52
      $region51: #{tpu_custom_call.1} parent=11 // pred_region
        _
      $region52: #{tpu_custom_call.1} parent=11 // pred_fallthru
        _
      // Predicated region
      $region53: #{tpu_custom_call.1} parent=11 // pred_check
        %p441 = pneg %p307
      $region54: #{tpu_custom_call.1} parent=11 // pred_check_branch
        %443 = sbr.rel (%p441) target = $region56
      $region55: #{tpu_custom_call.1} parent=11 // pred_region
        _
      $region56: #{tpu_custom_call.1} parent=11 // pred_fallthru
        _
      // Predicated region
      $region57: #{tpu_custom_call.1} parent=11 // pred_check
        %p444 = pneg %p328
      $region58: #{tpu_custom_call.1} parent=11 // pred_check_branch
        %446 = sbr.rel (%p444) target = $region60
      $region59: #{tpu_custom_call.1} parent=11 // pred_region
        _
      $region60: #{tpu_custom_call.1} parent=11 // pred_fallthru
        _
      // Predicated region
      $region61: #{tpu_custom_call.1} parent=11 // pred_check
        %p447 = pneg %p349
      $region62: #{tpu_custom_call.1} parent=11 // pred_check_branch
        %449 = sbr.rel (%p447) target = $region64
      $region63: #{tpu_custom_call.1} parent=11 // pred_region
        _
      $region64: #{tpu_custom_call.1} parent=11 // pred_fallthru
        _
      // Predicated region
      $region65: #{tpu_custom_call.1} parent=11 // pred_check
        %p450 = pneg %p370
      $region66: #{tpu_custom_call.1} parent=11 // pred_check_branch
        %452 = sbr.rel (%p450) target = $region68
      $region67: #{tpu_custom_call.1} parent=11 // pred_region
        _
      $region68: #{tpu_custom_call.1} parent=11 // pred_fallthru
        _
    $region12: #{tpu_custom_call.1} parent=5 // pred_fallthru
      _
    %p453 = scmp.lt.s32.totalorder %s24, 2
    // Predicated region
    $region69: #{tpu_custom_call.1} parent=5 // pred_check
      %p454 = pneg %p453
    $region70: #{tpu_custom_call.1} parent=5 // pred_check_branch
      %456 = sbr.rel (%p454) target = $region72
    $region71: #{tpu_custom_call.1} parent=5 // pred_region
      // Predicated region
      $region73: #{tpu_custom_call.1} parent=71 // pred_check
        %p457 = pneg %p44
      $region74: #{tpu_custom_call.1} parent=71 // pred_check_branch
        %459 = sbr.rel (%p457) target = $region76
      $region75: #{tpu_custom_call.1} parent=71 // pred_region
        %p460 = scmp.lt.s32.totalorder %s24, 1
        %s461 = scalar_select %p460, %s24, 1
        %s462 = smul.addr %s461, 8
        %s463 = scalar_lea.vmem %s0, %s462
      $region76: #{tpu_custom_call.1} parent=71 // pred_fallthru
        _
      // Predicated region
      $region77: #{tpu_custom_call.1} parent=71 // pred_check
        %p464 = pneg %p70
      $region78: #{tpu_custom_call.1} parent=71 // pred_check_branch
        %466 = sbr.rel (%p464) target = $region80
      $region79: #{tpu_custom_call.1} parent=71 // pred_region
        %p467 = scmp.lt.s32.totalorder %s24, 1
        %s468 = scalar_select %p467, %s24, 1
        %s469 = scalar_lea.vmem %s1, %s468
      $region80: #{tpu_custom_call.1} parent=71 // pred_fallthru
        _
    $region72: #{tpu_custom_call.1} parent=5 // pred_fallthru
      _
    %p470 = scmp.le.s32.totalorder 1, %s24
    %p471 = scmp.lt.s32.totalorder %s24, 3
    %p472 = pnand %p470, %p471
    %p473 = pneg %p472
    // Predicated region
    $region81: #{tpu_custom_call.1} parent=5 // pred_check
      _
    $region82: #{tpu_custom_call.1} parent=5 // pred_check_branch
      %475 = sbr.rel (%p472) target = $region84
    $region83: #{tpu_custom_call.1} parent=5 // pred_region
      %s476 = ssub.s32 %s24, 1
      %p477 = scmp.lt.s32.totalorder %s29, 1
      %s478 = scalar_select %p477, %s29, 1
      %s479 = smul.addr %s478, 8
      %s480 = scalar_lea.vmem %s0, %s479
      %p481 = pneg %p50
      %p482 = pneg %p47
      %p483 = scmp.lt.s32.totalorder %s29, 1
      %s484 = scalar_select %p483, %s29, 1
      %s485 = scalar_lea.vmem %s1, %s484
      %p486 = pneg %p76
      %p487 = pneg %p73
      %p488 = pneg %p97
      %p489 = pneg %p94
      %p490 = pneg %p118
      %p491 = pneg %p115
      %p492 = pneg %p139
      %p493 = pneg %p136
      %p494 = pneg %p160
      %p495 = pneg %p157
      %p496 = pneg %p181
      %p497 = pneg %p178
      %p498 = pneg %p202
      %p499 = pneg %p199
      %p500 = pneg %p223
      %p501 = pneg %p220
      %p502 = pneg %p244
      %p503 = pneg %p241
      %p504 = pneg %p265
      %p505 = pneg %p262
      %p506 = pneg %p286
      %p507 = pneg %p283
      %p508 = pneg %p307
      %p509 = pneg %p304
      %p510 = pneg %p328
      %p511 = pneg %p325
      %p512 = pneg %p349
      %p513 = pneg %p346
      %p514 = pneg %p370
      %p515 = pneg %p367
      %p516 = pneg %p396
      %p517 = pneg %p393
      %p518 = scmp.lt.s32.totalorder %s29, 1
      %s519 = scalar_select %p518, %s29, 1
      %s520 = scalar_lea.vmem %s16, %s519
      %p521 = scmp.lt.s32.totalorder %s29, 1
      %s522 = scalar_select %p521, %s29, 1
      %s523 = smul.addr %s522, 8
      %s524 = scalar_lea.vmem %s0, %s523
      %p525 = scmp.lt.s32.totalorder %s29, 1
      %s526 = scalar_select %p525, %s29, 1
      %s527 = scalar_lea.vmem %s1, %s526
      %p528 = scmp.lt.s32.totalorder %s29, 1
      %s529 = scalar_select %p528, %s29, 1
      %s530 = scalar_lea.vmem %s16, %s529
      %v531 = vld [vmem:[%s524] sm:$0xff]
      %v532 = vlaneseq
      %v533 = vand.u32 %v532, 127
      %534 = vset.pattern.permute.xlu0 0
      %535 = vperm.xlu0 %534, %v531
      %v536 = vpop.permute.xlu0 %535
      %vm537 = vcmp.eq.s32.totalorder %v533, %v536
      %v538 = vsel %vm537, 1, 0
      %v539 = vcvt.s32.f32 %v538
      %v540 = vld [vmem:[%s2] sm:$0xff]
      %v541 = vld [vmem:[%s2 + $0x8] sm:$0xff]
      %v542 = vld [vmem:[%s2 + $0x10] sm:$0xff]
      %v543 = vld [vmem:[%s2 + $0x18] sm:$0xff]
      %v544 = vld [vmem:[%s2 + $0x20] sm:$0xff]
      %v545 = vld [vmem:[%s2 + $0x28] sm:$0xff]
      %v546 = vld [vmem:[%s2 + $0x30] sm:$0xff]
      %v547 = vld [vmem:[%s2 + $0x38] sm:$0xff]
      %v548 = vld [vmem:[%s3] sm:$0xff]
      %vm549 = vcmask 523264
      %v551 = vsel %vm549, %v539, 0
      %553 = vmatpush.msra.mxu0 0.0
      %554 = vmatpush.msra.mxu0 0.0
      %555 = vmatpush.msra.mxu0 0.0
      %556 = vmatpush.msra.mxu0 0.0
      %557 = vmatpush.msra.mxu0 0.0
      %558 = vmatpush.msra.mxu0 0.0
      %559 = vmatpush.msra.mxu0 0.0
      %560 = vmatpush.msra.mxu0 0.0
      %561 = vmatpush.msra.mxu0 %v547
      %562 = vmatpush.msra.mxu0 %v546
      %563 = vmatpush.msra.mxu0 %v545
      %564 = vmatpush.msra.mxu0 %v544
      %565 = vmatpush.msra.mxu0 %v543
      %566 = vmatpush.msra.mxu0 %v542
      %567 = vmatpush.msra.mxu0 %v541
      %568 = vmatpush.msra.mxu0 %v540
      %569 = vmatmul.f32.gmra.mxu0 %v551
      %v570 = vpop.f32.mrf.mxu0
      %v571 = vadd.f32 %v548, %v570
      %572 = vdwg.mxu0
      %v573 = vld [vmem:[%s4] sm:$0x1]
      %v574 = vld [vmem:[%s4 + $0x1] sm:$0x1]
      %vm575 = vcmask 261120
      %v576 = vsel %vm575, %v571, 0.0
      %577 = vadd.xlane.f32.xlu0 %v576
      %v578 = vpop.xlane.xlu0 %577
      %v579 = vrcp.pop 32.0
      %v580 = vmul.f32 32.0, %v579
      %v581 = vsub.f32 1.0, %v580
      %v582 = vmul.f32 %v579, %v581
      %v583 = vadd.f32 %v579, %v582
      %vm584 = vweird.f32 %v579
      %v585 = vsel %vm584, %v579, %v583
      %v586 = vmul.f32 %v578, %v585
      %v587 = vsub.f32 %v571, %v586
      %v588 = vmul.f32 %v587, %v587
      %v589 = vsel %vm575, %v588, 0.0
      %590 = vadd.xlane.f32.xlu0 %v589
      %v591 = vpop.xlane.xlu0 %590
      %v592 = vmul.f32 %v591, %v585
      %v593 = vadd.f32 %v592, 1e-12
      %v594 = vrsqrt.pop %v593
      %v595 = vmul.f32 %v594, %v593
      %v596 = vmul.f32 %v595, %v594
      %v597 = vmul.f32 0.5, %v596
      %v598 = vsub.f32 1.5, %v597
      %v599 = vmul.f32 %v594, %v598
      %vm600 = vweird.f32 %v593
      %vm601 = vweird.f32 %v594
      %vm602 = vmor %vm600, %vm601
      %v603 = vsel %vm602, %v594, %v599
      %v604 = vmul.f32 %v587, %v603
      %v605 = vperm.slane %v573, 0
      %v606 = vmul.f32 %v604, %v605
      %v607 = vperm.slane %v574, 0
      %v608 = vadd.f32 %v606, %v607
      %v609 = vld [vmem:[%s527] sm:$0x1]
      %v610 = vsub.f32 1.0, %v609
      %v611 = vmul.f32 %v610, -10000.0
      %v612 = vld [vmem:[%s8] sm:$0x3f]
      %v613 = vld [vmem:[%s5] sm:$0xff]
      %v614 = vld [vmem:[%s5 + $0x8] sm:$0xff]
      %v615 = vld [vmem:[%s5 + $0x10] sm:$0xff]
      %v616 = vld [vmem:[%s5 + $0x18] sm:$0xff]
      %v617 = vld [vmem:[%s6] sm:$0x1]
      %v619 = vperm.slane %v617, 0
      %v622 = vsel %vm575, %v608, 0
      %624 = vmatpush.msra.mxu0 0.0
      %625 = vmatpush.msra.mxu0 0.0
      %626 = vmatpush.msra.mxu0 0.0
      %627 = vmatpush.msra.mxu0 0.0
      %628 = vmatpush.msra.mxu0 0.0
      %629 = vmatpush.msra.mxu0 0.0
      %630 = vmatpush.msra.mxu0 0.0
      %631 = vmatpush.msra.mxu0 0.0
      %632 = vmatpush.msra.mxu0 0.0
      %633 = vmatpush.msra.mxu0 0.0
      %634 = vmatpush.msra.mxu0 0.0
      %635 = vmatpush.msra.mxu0 0.0
      %636 = vmatpush.msra.mxu0 %v616
      %637 = vmatpush.msra.mxu0 %v615
      %638 = vmatpush.msra.mxu0 %v614
      %639 = vmatpush.msra.mxu0 %v613
      %640 = vmatmul.f32.gmra.mxu0 %v622
      %v641 = vpop.f32.mrf.mxu0
      %v642 = vadd.f32 %v619, %v641
      %643 = vdwg.mxu0
      %645 = vrot.lane.b32.xlu0 %v642, 120
      %v646 = vpop.permute.xlu0 %645
      %647 = vrot.lane.b32.xlu0 %v642, 112
      %v648 = vpop.permute.xlu0 %647
      %649 = vrot.lane.b32.xlu0 %v642, 104
      %v650 = vpop.permute.xlu0 %649
      %651 = vrot.lane.b32.xlu0 %v642, 96
      %v652 = vpop.permute.xlu0 %651
      %vm653 = vcmask 64512
      %v654 = vsel %vm653, %v642, 0
      %v656 = vsel %vm653, %v652, 0
      %658 = vmatpush.xpose.msra.mxu0 0.0
      %659 = vmatpush.xpose.msra.mxu0 0.0
      %660 = vmatpush.xpose.msra.mxu0 0.0
      %661 = vmatpush.xpose.msra.mxu0 0.0
      %662 = vmatpush.xpose.msra.mxu0 0.0
      %663 = vmatpush.xpose.msra.mxu0 0.0
      %664 = vmatpush.xpose.msra.mxu0 0.0
      %665 = vmatpush.xpose.msra.mxu0 0.0
      %666 = vmatpush.xpose.msra.mxu0 0.0
      %667 = vmatpush.xpose.msra.mxu0 0.0
      %668 = vmatpush.xpose.msra.mxu0 0.0
      %669 = vmatpush.xpose.msra.mxu0 0.0
      %670 = vmatpush.xpose.msra.mxu0 0.0
      %671 = vmatpush.xpose.msra.mxu0 0.0
      %672 = vmatpush.xpose.msra.mxu0 0.0
      %673 = vmatpush.xpose.msra.mxu0 %v656
      %674 = vmatmul.f32.gmra.mxu0 %v654
      %v675 = vpop.f32.mrf.mxu0
      %v676 = vadd.f32 0.0, %v675
      %677 = vdwg.mxu0
      %678 = vrot.lane.b32.xlu0 %v646, 96
      %v679 = vpop.permute.xlu0 %678
      %v680 = vsel %vm653, %v646, 0
      %v682 = vsel %vm653, %v679, 0
      %684 = vmatpush.xpose.msra.mxu0 0.0
      %685 = vmatpush.xpose.msra.mxu0 0.0
      %686 = vmatpush.xpose.msra.mxu0 0.0
      %687 = vmatpush.xpose.msra.mxu0 0.0
      %688 = vmatpush.xpose.msra.mxu0 0.0
      %689 = vmatpush.xpose.msra.mxu0 0.0
      %690 = vmatpush.xpose.msra.mxu0 0.0
      %691 = vmatpush.xpose.msra.mxu0 0.0
      %692 = vmatpush.xpose.msra.mxu0 0.0
      %693 = vmatpush.xpose.msra.mxu0 0.0
      %694 = vmatpush.xpose.msra.mxu0 0.0
      %695 = vmatpush.xpose.msra.mxu0 0.0
      %696 = vmatpush.xpose.msra.mxu0 0.0
      %697 = vmatpush.xpose.msra.mxu0 0.0
      %698 = vmatpush.xpose.msra.mxu0 0.0
      %699 = vmatpush.xpose.msra.mxu0 %v682
      %700 = vmatmul.f32.gmra.mxu0 %v680
      %v701 = vpop.f32.mrf.mxu0
      %v702 = vadd.f32 0.0, %v701
      %703 = vdwg.mxu0
      %704 = vrot.lane.b32.xlu0 %v648, 96
      %v705 = vpop.permute.xlu0 %704
      %v706 = vsel %vm653, %v648, 0
      %v708 = vsel %vm653, %v705, 0
      %710 = vmatpush.xpose.msra.mxu0 0.0
      %711 = vmatpush.xpose.msra.mxu0 0.0
      %712 = vmatpush.xpose.msra.mxu0 0.0
      %713 = vmatpush.xpose.msra.mxu0 0.0
      %714 = vmatpush.xpose.msra.mxu0 0.0
      %715 = vmatpush.xpose.msra.mxu0 0.0
      %716 = vmatpush.xpose.msra.mxu0 0.0
      %717 = vmatpush.xpose.msra.mxu0 0.0
      %718 = vmatpush.xpose.msra.mxu0 0.0
      %719 = vmatpush.xpose.msra.mxu0 0.0
      %720 = vmatpush.xpose.msra.mxu0 0.0
      %721 = vmatpush.xpose.msra.mxu0 0.0
      %722 = vmatpush.xpose.msra.mxu0 0.0
      %723 = vmatpush.xpose.msra.mxu0 0.0
      %724 = vmatpush.xpose.msra.mxu0 0.0
      %725 = vmatpush.xpose.msra.mxu0 %v708
      %726 = vmatmul.f32.gmra.mxu0 %v706
      %v727 = vpop.f32.mrf.mxu0
      %v728 = vadd.f32 0.0, %v727
      %729 = vdwg.mxu0
      %730 = vrot.lane.b32.xlu0 %v650, 96
      %v731 = vpop.permute.xlu0 %730
      %v732 = vsel %vm653, %v650, 0
      %v734 = vsel %vm653, %v731, 0
      %736 = vmatpush.xpose.msra.mxu0 0.0
      %737 = vmatpush.xpose.msra.mxu0 0.0
      %738 = vmatpush.xpose.msra.mxu0 0.0
      %739 = vmatpush.xpose.msra.mxu0 0.0
      %740 = vmatpush.xpose.msra.mxu0 0.0
      %741 = vmatpush.xpose.msra.mxu0 0.0
      %742 = vmatpush.xpose.msra.mxu0 0.0
      %743 = vmatpush.xpose.msra.mxu0 0.0
      %744 = vmatpush.xpose.msra.mxu0 0.0
      %745 = vmatpush.xpose.msra.mxu0 0.0
      %746 = vmatpush.xpose.msra.mxu0 0.0
      %747 = vmatpush.xpose.msra.mxu0 0.0
      %748 = vmatpush.xpose.msra.mxu0 0.0
      %749 = vmatpush.xpose.msra.mxu0 0.0
      %750 = vmatpush.xpose.msra.mxu0 0.0
      %751 = vmatpush.xpose.msra.mxu0 %v734
      %752 = vmatmul.f32.gmra.mxu0 %v732
      %v753 = vpop.f32.mrf.mxu0
      %v754 = vadd.f32 0.0, %v753
      %755 = vdwg.mxu0
      %v756 = vmul.f32 %v676, 0.35355338
      %v757 = vmul.f32 %v702, 0.35355338
      %v758 = vmul.f32 %v728, 0.35355338
      %v759 = vmul.f32 %v754, 0.35355338
      %v761 = vperm.slane %v611, 0
      %v763 = vadd.f32 %v756, %v761
      %v764 = vadd.f32 %v757, %v761
      %v765 = vadd.f32 %v758, %v761
      %v766 = vadd.f32 %v759, %v761
      %v767 = vsel %vm653, %v763, -inf
      %768 = vmax.xlane.f32.xlu0 %v767
      %v769 = vpop.xlane.xlu0 %768
      %v770 = vsel %vm653, %v764, -inf
      %771 = vmax.xlane.f32.xlu0 %v770
      %v772 = vpop.xlane.xlu0 %771
      %v773 = vsel %vm653, %v765, -inf
      %774 = vmax.xlane.f32.xlu0 %v773
      %v775 = vpop.xlane.xlu0 %774
      %v776 = vsel %vm653, %v766, -inf
      %777 = vmax.xlane.f32.xlu0 %v776
      %v778 = vpop.xlane.xlu0 %777
      %v779 = vsub.f32 %v763, %v769
      %v780 = vsub.f32 %v764, %v772
      %v781 = vsub.f32 %v765, %v775
      %v782 = vsub.f32 %v766, %v778
      %v783 = vmul.f32 %v779, 1.442695
      %v784 = vpow.pop %v783
      %v785 = vmul.f32 %v780, 1.442695
      %v786 = vpow.pop %v785
      %v787 = vmul.f32 %v781, 1.442695
      %v788 = vpow.pop %v787
      %v789 = vmul.f32 %v782, 1.442695
      %v790 = vpow.pop %v789
      %v791 = vsel %vm653, %v784, 0.0
      %792 = vadd.xlane.f32.xlu0 %v791
      %v793 = vpop.xlane.xlu0 %792
      %v794 = vsel %vm653, %v786, 0.0
      %795 = vadd.xlane.f32.xlu0 %v794
      %v796 = vpop.xlane.xlu0 %795
      %v797 = vsel %vm653, %v788, 0.0
      %798 = vadd.xlane.f32.xlu0 %v797
      %v799 = vpop.xlane.xlu0 %798
      %v800 = vsel %vm653, %v790, 0.0
      %801 = vadd.xlane.f32.xlu0 %v800
      %v802 = vpop.xlane.xlu0 %801
      %v803 = vrcp.pop %v793
      %v804 = vmul.f32 %v793, %v803
      %v805 = vsub.f32 1.0, %v804
      %v806 = vmul.f32 %v803, %v805
      %v807 = vadd.f32 %v803, %v806
      %vm808 = vweird.f32 %v793
      %vm809 = vweird.f32 %v803
      %vm810 = vmor %vm808, %vm809
      %v811 = vsel %vm810, %v803, %v807
      %v812 = vand.u32 2147483647, %v793
      %vm813 = vcmp.eq.f32.partialorder %v812, 8.507059e+37
      %v814 = vand.u32 %v793, 2147483648
      %v815 = vor.u32 1.1754944e-38, %v814
      %v816 = vsel %vm813, %v815, %v811
      %v817 = vmul.f32 %v784, %v816
      %v818 = vrcp.pop %v796
      %v819 = vmul.f32 %v796, %v818
      %v820 = vsub.f32 1.0, %v819
      %v821 = vmul.f32 %v818, %v820
      %v822 = vadd.f32 %v818, %v821
      %vm823 = vweird.f32 %v796
      %vm824 = vweird.f32 %v818
      %vm825 = vmor %vm823, %vm824
      %v826 = vsel %vm825, %v818, %v822
      %v827 = vand.u32 2147483647, %v796
      %vm828 = vcmp.eq.f32.partialorder %v827, 8.507059e+37
      %v829 = vand.u32 %v796, 2147483648
      %v830 = vor.u32 1.1754944e-38, %v829
      %v831 = vsel %vm828, %v830, %v826
      %v832 = vmul.f32 %v786, %v831
      %v833 = vrcp.pop %v799
      %v834 = vmul.f32 %v799, %v833
      %v835 = vsub.f32 1.0, %v834
      %v836 = vmul.f32 %v833, %v835
      %v837 = vadd.f32 %v833, %v836
      %vm838 = vweird.f32 %v799
      %vm839 = vweird.f32 %v833
      %vm840 = vmor %vm838, %vm839
      %v841 = vsel %vm840, %v833, %v837
      %v842 = vand.u32 2147483647, %v799
      %vm843 = vcmp.eq.f32.partialorder %v842, 8.507059e+37
      %v844 = vand.u32 %v799, 2147483648
      %v845 = vor.u32 1.1754944e-38, %v844
      %v846 = vsel %vm843, %v845, %v841
      %v847 = vmul.f32 %v788, %v846
      %v848 = vrcp.pop %v802
      %v849 = vmul.f32 %v802, %v848
      %v850 = vsub.f32 1.0, %v849
      %v851 = vmul.f32 %v848, %v850
      %v852 = vadd.f32 %v848, %v851
      %vm853 = vweird.f32 %v802
      %vm854 = vweird.f32 %v848
      %vm855 = vmor %vm853, %vm854
      %v856 = vsel %vm855, %v848, %v852
      %v857 = vand.u32 2147483647, %v802
      %vm858 = vcmp.eq.f32.partialorder %v857, 8.507059e+37
      %v859 = vand.u32 %v802, 2147483648
      %v860 = vor.u32 1.1754944e-38, %v859
      %v861 = vsel %vm858, %v860, %v856
      %v862 = vmul.f32 %v790, %v861
      %863 = vrot.lane.b32.xlu0 %v642, 64
      %v864 = vpop.permute.xlu0 %863
      %v867 = vsel %vm653, %v817, 0
      %869 = vmatpush.msra.mxu0 0.0
      %870 = vmatpush.msra.mxu0 0.0
      %871 = vmatpush.msra.mxu0 0.0
      %872 = vmatpush.msra.mxu0 0.0
      %873 = vmatpush.msra.mxu0 0.0
      %874 = vmatpush.msra.mxu0 0.0
      %875 = vmatpush.msra.mxu0 0.0
      %876 = vmatpush.msra.mxu0 0.0
      %877 = vmatpush.msra.mxu0 0.0
      %878 = vmatpush.msra.mxu0 0.0
      %879 = vmatpush.msra.mxu0 0.0
      %880 = vmatpush.msra.mxu0 0.0
      %881 = vmatpush.msra.mxu0 0.0
      %882 = vmatpush.msra.mxu0 0.0
      %883 = vmatpush.msra.mxu0 0.0
      %884 = vmatpush.msra.mxu0 %v864
      %885 = vmatmul.f32.gmra.mxu0 %v867
      %v886 = vpop.f32.mrf.mxu0
      %v887 = vadd.f32 0.0, %v886
      %888 = vdwg.mxu0
      %889 = vrot.lane.b32.xlu0 %v646, 64
      %v890 = vpop.permute.xlu0 %889
      %v893 = vsel %vm653, %v832, 0
      %895 = vmatpush.msra.mxu0 0.0
      %896 = vmatpush.msra.mxu0 0.0
      %897 = vmatpush.msra.mxu0 0.0
      %898 = vmatpush.msra.mxu0 0.0
      %899 = vmatpush.msra.mxu0 0.0
      %900 = vmatpush.msra.mxu0 0.0
      %901 = vmatpush.msra.mxu0 0.0
      %902 = vmatpush.msra.mxu0 0.0
      %903 = vmatpush.msra.mxu0 0.0
      %904 = vmatpush.msra.mxu0 0.0
      %905 = vmatpush.msra.mxu0 0.0
      %906 = vmatpush.msra.mxu0 0.0
      %907 = vmatpush.msra.mxu0 0.0
      %908 = vmatpush.msra.mxu0 0.0
      %909 = vmatpush.msra.mxu0 0.0
      %910 = vmatpush.msra.mxu0 %v890
      %911 = vmatmul.f32.gmra.mxu0 %v893
      %v912 = vpop.f32.mrf.mxu0
      %v913 = vadd.f32 0.0, %v912
      %914 = vdwg.mxu0
      %915 = vrot.lane.b32.xlu0 %v648, 64
      %v916 = vpop.permute.xlu0 %915
      %v919 = vsel %vm653, %v847, 0
      %921 = vmatpush.msra.mxu0 0.0
      %922 = vmatpush.msra.mxu0 0.0
      %923 = vmatpush.msra.mxu0 0.0
      %924 = vmatpush.msra.mxu0 0.0
      %925 = vmatpush.msra.mxu0 0.0
      %926 = vmatpush.msra.mxu0 0.0
      %927 = vmatpush.msra.mxu0 0.0
      %928 = vmatpush.msra.mxu0 0.0
      %929 = vmatpush.msra.mxu0 0.0
      %930 = vmatpush.msra.mxu0 0.0
      %931 = vmatpush.msra.mxu0 0.0
      %932 = vmatpush.msra.mxu0 0.0
      %933 = vmatpush.msra.mxu0 0.0
      %934 = vmatpush.msra.mxu0 0.0
      %935 = vmatpush.msra.mxu0 0.0
      %936 = vmatpush.msra.mxu0 %v916
      %937 = vmatmul.f32.gmra.mxu0 %v919
      %v938 = vpop.f32.mrf.mxu0
      %v939 = vadd.f32 0.0, %v938
      %940 = vdwg.mxu0
      %941 = vrot.lane.b32.xlu0 %v650, 64
      %v942 = vpop.permute.xlu0 %941
      %v945 = vsel %vm653, %v862, 0
      %947 = vmatpush.msra.mxu0 0.0
      %948 = vmatpush.msra.mxu0 0.0
      %949 = vmatpush.msra.mxu0 0.0
      %950 = vmatpush.msra.mxu0 0.0
      %951 = vmatpush.msra.mxu0 0.0
      %952 = vmatpush.msra.mxu0 0.0
      %953 = vmatpush.msra.mxu0 0.0
      %954 = vmatpush.msra.mxu0 0.0
      %955 = vmatpush.msra.mxu0 0.0
      %956 = vmatpush.msra.mxu0 0.0
      %957 = vmatpush.msra.mxu0 0.0
      %958 = vmatpush.msra.mxu0 0.0
      %959 = vmatpush.msra.mxu0 0.0
      %960 = vmatpush.msra.mxu0 0.0
      %961 = vmatpush.msra.mxu0 0.0
      %962 = vmatpush.msra.mxu0 %v942
      %963 = vmatmul.f32.gmra.mxu0 %v945
      %v964 = vpop.f32.mrf.mxu0
      %v965 = vadd.f32 0.0, %v964
      %966 = vdwg.mxu0
      %968 = vrot.lane.b32.xlu0 %v913, 8
      %v969 = vpop.permute.xlu0 %968
      %972 = vrot.lane.b32.xlu0 %v939, 16
      %v973 = vpop.permute.xlu0 %972
      %976 = vrot.lane.b32.xlu0 %v965, 24
      %v977 = vpop.permute.xlu0 %976
      %v979 = vsel %vm653, %v887, %v969
      %vm980 = vcmask 130048
      %v981 = vsel %vm980, %v979, %v973
      %vm982 = vcmask 195584
      %v983 = vsel %vm982, %v981, %v977
      %v984 = vld [vmem:[%s7] sm:$0xff]
      %v985 = vld [vmem:[%s7 + $0x8] sm:$0xff]
      %v986 = vld [vmem:[%s7 + $0x10] sm:$0xff]
      %v987 = vld [vmem:[%s7 + $0x18] sm:$0xff]
      %v988 = vperm.slane %v612, 0
      %v990 = vsel %vm575, %v983, 0
      %992 = vmatpush.msra.mxu0 0.0
      %993 = vmatpush.msra.mxu0 0.0
      %994 = vmatpush.msra.mxu0 0.0
      %995 = vmatpush.msra.mxu0 0.0
      %996 = vmatpush.msra.mxu0 0.0
      %997 = vmatpush.msra.mxu0 0.0
      %998 = vmatpush.msra.mxu0 0.0
      %999 = vmatpush.msra.mxu0 0.0
      %1000 = vmatpush.msra.mxu0 0.0
      %1001 = vmatpush.msra.mxu0 0.0
      %1002 = vmatpush.msra.mxu0 0.0
      %1003 = vmatpush.msra.mxu0 0.0
      %1004 = vmatpush.msra.mxu0 %v987
      %1005 = vmatpush.msra.mxu0 %v986
      %1006 = vmatpush.msra.mxu0 %v985
      %1007 = vmatpush.msra.mxu0 %v984
      %1008 = vmatmul.f32.gmra.mxu0 %v990
      %v1009 = vpop.f32.mrf.mxu0
      %v1010 = vadd.f32 %v988, %v1009
      %1011 = vdwg.mxu0
      %v1012 = vadd.f32 %v1010, %v608
      %v1013 = vsel %vm575, %v1012, 0.0
      %1014 = vadd.xlane.f32.xlu0 %v1013
      %v1015 = vpop.xlane.xlu0 %1014
      %v1016 = vmul.f32 %v1015, %v585
      %v1017 = vsub.f32 %v1012, %v1016
      %v1018 = vmul.f32 %v1017, %v1017
      %v1019 = vsel %vm575, %v1018, 0.0
      %1020 = vadd.xlane.f32.xlu0 %v1019
      %v1021 = vpop.xlane.xlu0 %1020
      %v1022 = vmul.f32 %v1021, %v585
      %v1023 = vadd.f32 %v1022, 1e-12
      %v1024 = vrsqrt.pop %v1023
      %v1025 = vmul.f32 %v1024, %v1023
      %v1026 = vmul.f32 %v1025, %v1024
      %v1027 = vmul.f32 0.5, %v1026
      %v1028 = vsub.f32 1.5, %v1027
      %v1029 = vmul.f32 %v1024, %v1028
      %vm1030 = vweird.f32 %v1023
      %vm1031 = vweird.f32 %v1024
      %vm1032 = vmor %vm1030, %vm1031
      %v1033 = vsel %vm1032, %v1024, %v1029
      %v1034 = vmul.f32 %v1017, %v1033
      %v1035 = vperm.slane %v612, 1
      %v1036 = vmul.f32 %v1034, %v1035
      %v1037 = vperm.slane %v612, 2
      %v1038 = vadd.f32 %v1036, %v1037
      %v1039 = vld [vmem:[%s9] sm:$0xff]
      %v1040 = vld [vmem:[%s9 + $0x8] sm:$0xff]
      %v1041 = vld [vmem:[%s9 + $0x10] sm:$0xff]
      %v1042 = vld [vmem:[%s9 + $0x18] sm:$0xff]
      %v1043 = vld [vmem:[%s10] sm:$0x1]
      %v1045 = vperm.slane %v1043, 0
      %v1048 = vsel %vm575, %v1038, 0
      %1050 = vmatpush.msra.mxu0 0.0
      %1051 = vmatpush.msra.mxu0 0.0
      %1052 = vmatpush.msra.mxu0 0.0
      %1053 = vmatpush.msra.mxu0 0.0
      %1054 = vmatpush.msra.mxu0 0.0
      %1055 = vmatpush.msra.mxu0 0.0
      %1056 = vmatpush.msra.mxu0 0.0
      %1057 = vmatpush.msra.mxu0 0.0
      %1058 = vmatpush.msra.mxu0 0.0
      %1059 = vmatpush.msra.mxu0 0.0
      %1060 = vmatpush.msra.mxu0 0.0
      %1061 = vmatpush.msra.mxu0 0.0
      %1062 = vmatpush.msra.mxu0 %v1042
      %1063 = vmatpush.msra.mxu0 %v1041
      %1064 = vmatpush.msra.mxu0 %v1040
      %1065 = vmatpush.msra.mxu0 %v1039
      %1066 = vmatmul.f32.gmra.mxu0 %v1048
      %v1067 = vpop.f32.mrf.mxu0
      %v1068 = vadd.f32 %v1045, %v1067
      %1069 = vdwg.mxu0
      %v1070 = vmul.f32 %v1068, 0.5
      %v1071 = vmul.f32 %v1068, 0.70710677
      %v1072 = vmul.f32 %v1071, %v1071
      %v1073 = vmin.f32 16.0, %v1072
      %v1074 = vmul.f32 %v1073, 2.1237322e-06
      %v1075 = vadd.f32 %v1074, 0.00028619796
      %v1076 = vmul.f32 %v1073, %v1075
      %v1077 = vadd.f32 %v1076, 0.0036580483
      %v1078 = vmul.f32 %v1073, %v1077
      %v1079 = vadd.f32 %v1078, 0.05243302
      %v1080 = vmul.f32 %v1073, %v1079
      %v1081 = vadd.f32 %v1080, 0.18741608
      %v1082 = vmul.f32 %v1073, %v1081
      %v1083 = vadd.f32 %v1082, 1.1283791
      %v1084 = vmul.f32 %v1071, %v1083
      %v1085 = vmul.f32 %v1073, 3.8918573e-05
      %v1086 = vadd.f32 %v1085, 0.001143296
      %v1087 = vmul.f32 %v1073, %v1086
      %v1088 = vadd.f32 %v1087, 0.014752088
      %v1089 = vmul.f32 %v1073, %v1088
      %v1090 = vadd.f32 %v1089, 0.112945676
      %v1091 = vmul.f32 %v1073, %v1090
      %v1092 = vadd.f32 %v1091, 0.4994258
      %v1093 = vmul.f32 %v1073, %v1092
      %v1094 = vadd.f32 %v1093, 1.0
      %v1095 = vrcp.pop %v1094
      %v1096 = vmul.f32 %v1094, %v1095
      %v1097 = vsub.f32 1.0, %v1096
      %v1098 = vmul.f32 %v1095, %v1097
      %v1099 = vadd.f32 %v1095, %v1098
      %vm1100 = vweird.f32 %v1094
      %vm1101 = vweird.f32 %v1095
      %vm1102 = vmor %vm1100, %vm1101
      %v1103 = vsel %vm1102, %v1095, %v1099
      %v1104 = vand.u32 2147483647, %v1094
      %vm1105 = vcmp.eq.f32.partialorder %v1104, 8.507059e+37
      %v1106 = vand.u32 %v1094, 2147483648
      %v1107 = vor.u32 1.1754944e-38, %v1106
      %v1108 = vsel %vm1105, %v1107, %v1103
      %v1109 = vmul.f32 %v1084, %v1108
      %v1110 = vmin.f32 %v1109, 1.0
      %v1111 = vmax.f32 %v1110, -1.0
      %v1112 = vadd.f32 %v1111, 1.0
      %v1113 = vmul.f32 %v1070, %v1112
      %v1114 = vld [vmem:[%s11] sm:$0xff]
      %v1115 = vld [vmem:[%s11 + $0x8] sm:$0xff]
      %v1116 = vld [vmem:[%s11 + $0x10] sm:$0xff]
      %v1117 = vld [vmem:[%s11 + $0x18] sm:$0xff]
      %v1118 = vld [vmem:[%s11 + $0x20] sm:$0xff]
      %v1119 = vld [vmem:[%s11 + $0x28] sm:$0xff]
      %v1120 = vld [vmem:[%s11 + $0x30] sm:$0xff]
      %v1121 = vld [vmem:[%s11 + $0x38] sm:$0xff]
      %v1122 = vperm.slane %v612, 3
      %v1124 = vsel %vm549, %v1113, 0
      %1126 = vmatpush.msra.mxu0 0.0
      %1127 = vmatpush.msra.mxu0 0.0
      %1128 = vmatpush.msra.mxu0 0.0
      %1129 = vmatpush.msra.mxu0 0.0
      %1130 = vmatpush.msra.mxu0 0.0
      %1131 = vmatpush.msra.mxu0 0.0
      %1132 = vmatpush.msra.mxu0 0.0
      %1133 = vmatpush.msra.mxu0 0.0
      %1134 = vmatpush.msra.mxu0 %v1121
      %1135 = vmatpush.msra.mxu0 %v1120
      %1136 = vmatpush.msra.mxu0 %v1119
      %1137 = vmatpush.msra.mxu0 %v1118
      %1138 = vmatpush.msra.mxu0 %v1117
      %1139 = vmatpush.msra.mxu0 %v1116
      %1140 = vmatpush.msra.mxu0 %v1115
      %1141 = vmatpush.msra.mxu0 %v1114
      %1142 = vmatmul.f32.gmra.mxu0 %v1124
      %v1143 = vpop.f32.mrf.mxu0
      %v1144 = vadd.f32 %v1122, %v1143
      %1145 = vdwg.mxu0
      %v1146 = vadd.f32 %v1144, %v1038
      %v1147 = vsel %vm575, %v1146, 0.0
      %1148 = vadd.xlane.f32.xlu0 %v1147
      %v1149 = vpop.xlane.xlu0 %1148
      %v1150 = vmul.f32 %v1149, %v585
      %v1151 = vsub.f32 %v1146, %v1150
      %v1152 = vmul.f32 %v1151, %v1151
      %v1153 = vsel %vm575, %v1152, 0.0
      %1154 = vadd.xlane.f32.xlu0 %v1153
      %v1155 = vpop.xlane.xlu0 %1154
      %v1156 = vmul.f32 %v1155, %v585
      %v1157 = vadd.f32 %v1156, 1e-12
      %v1158 = vrsqrt.pop %v1157
      %v1159 = vmul.f32 %v1158, %v1157
      %v1160 = vmul.f32 %v1159, %v1158
      %v1161 = vmul.f32 0.5, %v1160
      %v1162 = vsub.f32 1.5, %v1161
      %v1163 = vmul.f32 %v1158, %v1162
      %vm1164 = vweird.f32 %v1157
      %vm1165 = vweird.f32 %v1158
      %vm1166 = vmor %vm1164, %vm1165
      %v1167 = vsel %vm1166, %v1158, %v1163
      %v1168 = vmul.f32 %v1151, %v1167
      %v1169 = vperm.slane %v612, 4
      %v1170 = vmul.f32 %v1168, %v1169
      %v1171 = vperm.slane %v612, 5
      %v1172 = vadd.f32 %v1170, %v1171
      %s1173 = scalar_lea.vmem %s8, 8
      %v1174 = vld [vmem:[%s1173] sm:$0x3f]
      %s1175 = scalar_lea.vmem %s5, 32
      %v1176 = vld [vmem:[%s1175] sm:$0xff]
      %v1177 = vld [vmem:[%s1175 + $0x8] sm:$0xff]
      %v1178 = vld [vmem:[%s1175 + $0x10] sm:$0xff]
      %v1179 = vld [vmem:[%s1175 + $0x18] sm:$0xff]
      %s1180 = scalar_lea.vmem %s6, 1
      %v1181 = vld [vmem:[%s1180] sm:$0x1]
      %v1183 = vperm.slane %v1181, 0
      %v1186 = vsel %vm575, %v1172, 0
      %1188 = vmatpush.msra.mxu0 0.0
      %1189 = vmatpush.msra.mxu0 0.0
      %1190 = vmatpush.msra.mxu0 0.0
      %1191 = vmatpush.msra.mxu0 0.0
      %1192 = vmatpush.msra.mxu0 0.0
      %1193 = vmatpush.msra.mxu0 0.0
      %1194 = vmatpush.msra.mxu0 0.0
      %1195 = vmatpush.msra.mxu0 0.0
      %1196 = vmatpush.msra.mxu0 0.0
      %1197 = vmatpush.msra.mxu0 0.0
      %1198 = vmatpush.msra.mxu0 0.0
      %1199 = vmatpush.msra.mxu0 0.0
      %1200 = vmatpush.msra.mxu0 %v1179
      %1201 = vmatpush.msra.mxu0 %v1178
      %1202 = vmatpush.msra.mxu0 %v1177
      %1203 = vmatpush.msra.mxu0 %v1176
      %1204 = vmatmul.f32.gmra.mxu0 %v1186
      %v1205 = vpop.f32.mrf.mxu0
      %v1206 = vadd.f32 %v1183, %v1205
      %1207 = vdwg.mxu0
      %1209 = vrot.lane.b32.xlu0 %v1206, 120
      %v1210 = vpop.permute.xlu0 %1209
      %1211 = vrot.lane.b32.xlu0 %v1206, 112
      %v1212 = vpop.permute.xlu0 %1211
      %1213 = vrot.lane.b32.xlu0 %v1206, 104
      %v1214 = vpop.permute.xlu0 %1213
      %1215 = vrot.lane.b32.xlu0 %v1206, 96
      %v1216 = vpop.permute.xlu0 %1215
      %v1217 = vsel %vm653, %v1206, 0
      %v1219 = vsel %vm653, %v1216, 0
      %1221 = vmatpush.xpose.msra.mxu0 0.0
      %1222 = vmatpush.xpose.msra.mxu0 0.0
      %1223 = vmatpush.xpose.msra.mxu0 0.0
      %1224 = vmatpush.xpose.msra.mxu0 0.0
      %1225 = vmatpush.xpose.msra.mxu0 0.0
      %1226 = vmatpush.xpose.msra.mxu0 0.0
      %1227 = vmatpush.xpose.msra.mxu0 0.0
      %1228 = vmatpush.xpose.msra.mxu0 0.0
      %1229 = vmatpush.xpose.msra.mxu0 0.0
      %1230 = vmatpush.xpose.msra.mxu0 0.0
      %1231 = vmatpush.xpose.msra.mxu0 0.0
      %1232 = vmatpush.xpose.msra.mxu0 0.0
      %1233 = vmatpush.xpose.msra.mxu0 0.0
      %1234 = vmatpush.xpose.msra.mxu0 0.0
      %1235 = vmatpush.xpose.msra.mxu0 0.0
      %1236 = vmatpush.xpose.msra.mxu0 %v1219
      %1237 = vmatmul.f32.gmra.mxu0 %v1217
      %v1238 = vpop.f32.mrf.mxu0
      %v1239 = vadd.f32 0.0, %v1238
      %1240 = vdwg.mxu0
      %1241 = vrot.lane.b32.xlu0 %v1210, 96
      %v1242 = vpop.permute.xlu0 %1241
      %v1243 = vsel %vm653, %v1210, 0
      %v1245 = vsel %vm653, %v1242, 0
      %1247 = vmatpush.xpose.msra.mxu0 0.0
      %1248 = vmatpush.xpose.msra.mxu0 0.0
      %1249 = vmatpush.xpose.msra.mxu0 0.0
      %1250 = vmatpush.xpose.msra.mxu0 0.0
      %1251 = vmatpush.xpose.msra.mxu0 0.0
      %1252 = vmatpush.xpose.msra.mxu0 0.0
      %1253 = vmatpush.xpose.msra.mxu0 0.0
      %1254 = vmatpush.xpose.msra.mxu0 0.0
      %1255 = vmatpush.xpose.msra.mxu0 0.0
      %1256 = vmatpush.xpose.msra.mxu0 0.0
      %1257 = vmatpush.xpose.msra.mxu0 0.0
      %1258 = vmatpush.xpose.msra.mxu0 0.0
      %1259 = vmatpush.xpose.msra.mxu0 0.0
      %1260 = vmatpush.xpose.msra.mxu0 0.0
      %1261 = vmatpush.xpose.msra.mxu0 0.0
      %1262 = vmatpush.xpose.msra.mxu0 %v1245
      %1263 = vmatmul.f32.gmra.mxu0 %v1243
      %v1264 = vpop.f32.mrf.mxu0
      %v1265 = vadd.f32 0.0, %v1264
      %1266 = vdwg.mxu0
      %1267 = vrot.lane.b32.xlu0 %v1212, 96
      %v1268 = vpop.permute.xlu0 %1267
      %v1269 = vsel %vm653, %v1212, 0
      %v1271 = vsel %vm653, %v1268, 0
      %1273 = vmatpush.xpose.msra.mxu0 0.0
      %1274 = vmatpush.xpose.msra.mxu0 0.0
      %1275 = vmatpush.xpose.msra.mxu0 0.0
      %1276 = vmatpush.xpose.msra.mxu0 0.0
      %1277 = vmatpush.xpose.msra.mxu0 0.0
      %1278 = vmatpush.xpose.msra.mxu0 0.0
      %1279 = vmatpush.xpose.msra.mxu0 0.0
      %1280 = vmatpush.xpose.msra.mxu0 0.0
      %1281 = vmatpush.xpose.msra.mxu0 0.0
      %1282 = vmatpush.xpose.msra.mxu0 0.0
      %1283 = vmatpush.xpose.msra.mxu0 0.0
      %1284 = vmatpush.xpose.msra.mxu0 0.0
      %1285 = vmatpush.xpose.msra.mxu0 0.0
      %1286 = vmatpush.xpose.msra.mxu0 0.0
      %1287 = vmatpush.xpose.msra.mxu0 0.0
      %1288 = vmatpush.xpose.msra.mxu0 %v1271
      %1289 = vmatmul.f32.gmra.mxu0 %v1269
      %v1290 = vpop.f32.mrf.mxu0
      %v1291 = vadd.f32 0.0, %v1290
      %1292 = vdwg.mxu0
      %1293 = vrot.lane.b32.xlu0 %v1214, 96
      %v1294 = vpop.permute.xlu0 %1293
      %v1295 = vsel %vm653, %v1214, 0
      %v1297 = vsel %vm653, %v1294, 0
      %1299 = vmatpush.xpose.msra.mxu0 0.0
      %1300 = vmatpush.xpose.msra.mxu0 0.0
      %1301 = vmatpush.xpose.msra.mxu0 0.0
      %1302 = vmatpush.xpose.msra.mxu0 0.0
      %1303 = vmatpush.xpose.msra.mxu0 0.0
      %1304 = vmatpush.xpose.msra.mxu0 0.0
      %1305 = vmatpush.xpose.msra.mxu0 0.0
      %1306 = vmatpush.xpose.msra.mxu0 0.0
      %1307 = vmatpush.xpose.msra.mxu0 0.0
      %1308 = vmatpush.xpose.msra.mxu0 0.0
      %1309 = vmatpush.xpose.msra.mxu0 0.0
      %1310 = vmatpush.xpose.msra.mxu0 0.0
      %1311 = vmatpush.xpose.msra.mxu0 0.0
      %1312 = vmatpush.xpose.msra.mxu0 0.0
      %1313 = vmatpush.xpose.msra.mxu0 0.0
      %1314 = vmatpush.xpose.msra.mxu0 %v1297
      %1315 = vmatmul.f32.gmra.mxu0 %v1295
      %v1316 = vpop.f32.mrf.mxu0
      %v1317 = vadd.f32 0.0, %v1316
      %1318 = vdwg.mxu0
      %v1319 = vmul.f32 %v1239, 0.35355338
      %v1320 = vmul.f32 %v1265, 0.35355338
      %v1321 = vmul.f32 %v1291, 0.35355338
      %v1322 = vmul.f32 %v1317, 0.35355338
      %v1323 = vadd.f32 %v1319, %v761
      %v1324 = vadd.f32 %v1320, %v761
      %v1325 = vadd.f32 %v1321, %v761
      %v1326 = vadd.f32 %v1322, %v761
      %v1327 = vsel %vm653, %v1323, -inf
      %1328 = vmax.xlane.f32.xlu0 %v1327
      %v1329 = vpop.xlane.xlu0 %1328
      %v1330 = vsel %vm653, %v1324, -inf
      %1331 = vmax.xlane.f32.xlu0 %v1330
      %v1332 = vpop.xlane.xlu0 %1331
      %v1333 = vsel %vm653, %v1325, -inf
      %1334 = vmax.xlane.f32.xlu0 %v1333
      %v1335 = vpop.xlane.xlu0 %1334
      %v1336 = vsel %vm653, %v1326, -inf
      %1337 = vmax.xlane.f32.xlu0 %v1336
      %v1338 = vpop.xlane.xlu0 %1337
      %v1339 = vsub.f32 %v1323, %v1329
      %v1340 = vsub.f32 %v1324, %v1332
      %v1341 = vsub.f32 %v1325, %v1335
      %v1342 = vsub.f32 %v1326, %v1338
      %v1343 = vmul.f32 %v1339, 1.442695
      %v1344 = vpow.pop %v1343
      %v1345 = vmul.f32 %v1340, 1.442695
      %v1346 = vpow.pop %v1345
      %v1347 = vmul.f32 %v1341, 1.442695
      %v1348 = vpow.pop %v1347
      %v1349 = vmul.f32 %v1342, 1.442695
      %v1350 = vpow.pop %v1349
      %v1351 = vsel %vm653, %v1344, 0.0
      %1352 = vadd.xlane.f32.xlu0 %v1351
      %v1353 = vpop.xlane.xlu0 %1352
      %v1354 = vsel %vm653, %v1346, 0.0
      %1355 = vadd.xlane.f32.xlu0 %v1354
      %v1356 = vpop.xlane.xlu0 %1355
      %v1357 = vsel %vm653, %v1348, 0.0
      %1358 = vadd.xlane.f32.xlu0 %v1357
      %v1359 = vpop.xlane.xlu0 %1358
      %v1360 = vsel %vm653, %v1350, 0.0
      %1361 = vadd.xlane.f32.xlu0 %v1360
      %v1362 = vpop.xlane.xlu0 %1361
      %v1363 = vrcp.pop %v1353
      %v1364 = vmul.f32 %v1353, %v1363
      %v1365 = vsub.f32 1.0, %v1364
      %v1366 = vmul.f32 %v1363, %v1365
      %v1367 = vadd.f32 %v1363, %v1366
      %vm1368 = vweird.f32 %v1353
      %vm1369 = vweird.f32 %v1363
      %vm1370 = vmor %vm1368, %vm1369
      %v1371 = vsel %vm1370, %v1363, %v1367
      %v1372 = vand.u32 2147483647, %v1353
      %vm1373 = vcmp.eq.f32.partialorder %v1372, 8.507059e+37
      %v1374 = vand.u32 %v1353, 2147483648
      %v1375 = vor.u32 1.1754944e-38, %v1374
      %v1376 = vsel %vm1373, %v1375, %v1371
      %v1377 = vmul.f32 %v1344, %v1376
      %v1378 = vrcp.pop %v1356
      %v1379 = vmul.f32 %v1356, %v1378
      %v1380 = vsub.f32 1.0, %v1379
      %v1381 = vmul.f32 %v1378, %v1380
      %v1382 = vadd.f32 %v1378, %v1381
      %vm1383 = vweird.f32 %v1356
      %vm1384 = vweird.f32 %v1378
      %vm1385 = vmor %vm1383, %vm1384
      %v1386 = vsel %vm1385, %v1378, %v1382
      %v1387 = vand.u32 2147483647, %v1356
      %vm1388 = vcmp.eq.f32.partialorder %v1387, 8.507059e+37
      %v1389 = vand.u32 %v1356, 2147483648
      %v1390 = vor.u32 1.1754944e-38, %v1389
      %v1391 = vsel %vm1388, %v1390, %v1386
      %v1392 = vmul.f32 %v1346, %v1391
      %v1393 = vrcp.pop %v1359
      %v1394 = vmul.f32 %v1359, %v1393
      %v1395 = vsub.f32 1.0, %v1394
      %v1396 = vmul.f32 %v1393, %v1395
      %v1397 = vadd.f32 %v1393, %v1396
      %vm1398 = vweird.f32 %v1359
      %vm1399 = vweird.f32 %v1393
      %vm1400 = vmor %vm1398, %vm1399
      %v1401 = vsel %vm1400, %v1393, %v1397
      %v1402 = vand.u32 2147483647, %v1359
      %vm1403 = vcmp.eq.f32.partialorder %v1402, 8.507059e+37
      %v1404 = vand.u32 %v1359, 2147483648
      %v1405 = vor.u32 1.1754944e-38, %v1404
      %v1406 = vsel %vm1403, %v1405, %v1401
      %v1407 = vmul.f32 %v1348, %v1406
      %v1408 = vrcp.pop %v1362
      %v1409 = vmul.f32 %v1362, %v1408
      %v1410 = vsub.f32 1.0, %v1409
      %v1411 = vmul.f32 %v1408, %v1410
      %v1412 = vadd.f32 %v1408, %v1411
      %vm1413 = vweird.f32 %v1362
      %vm1414 = vweird.f32 %v1408
      %vm1415 = vmor %vm1413, %vm1414
      %v1416 = vsel %vm1415, %v1408, %v1412
      %v1417 = vand.u32 2147483647, %v1362
      %vm1418 = vcmp.eq.f32.partialorder %v1417, 8.507059e+37
      %v1419 = vand.u32 %v1362, 2147483648
      %v1420 = vor.u32 1.1754944e-38, %v1419
      %v1421 = vsel %vm1418, %v1420, %v1416
      %v1422 = vmul.f32 %v1350, %v1421
      %1423 = vrot.lane.b32.xlu0 %v1206, 64
      %v1424 = vpop.permute.xlu0 %1423
      %v1427 = vsel %vm653, %v1377, 0
      %1429 = vmatpush.msra.mxu0 0.0
      %1430 = vmatpush.msra.mxu0 0.0
      %1431 = vmatpush.msra.mxu0 0.0
      %1432 = vmatpush.msra.mxu0 0.0
      %1433 = vmatpush.msra.mxu0 0.0
      %1434 = vmatpush.msra.mxu0 0.0
      %1435 = vmatpush.msra.mxu0 0.0
      %1436 = vmatpush.msra.mxu0 0.0
      %1437 = vmatpush.msra.mxu0 0.0
      %1438 = vmatpush.msra.mxu0 0.0
      %1439 = vmatpush.msra.mxu0 0.0
      %1440 = vmatpush.msra.mxu0 0.0
      %1441 = vmatpush.msra.mxu0 0.0
      %1442 = vmatpush.msra.mxu0 0.0
      %1443 = vmatpush.msra.mxu0 0.0
      %1444 = vmatpush.msra.mxu0 %v1424
      %1445 = vmatmul.f32.gmra.mxu0 %v1427
      %v1446 = vpop.f32.mrf.mxu0
      %v1447 = vadd.f32 0.0, %v1446
      %1448 = vdwg.mxu0
      %1449 = vrot.lane.b32.xlu0 %v1210, 64
      %v1450 = vpop.permute.xlu0 %1449
      %v1453 = vsel %vm653, %v1392, 0
      %1455 = vmatpush.msra.mxu0 0.0
      %1456 = vmatpush.msra.mxu0 0.0
      %1457 = vmatpush.msra.mxu0 0.0
      %1458 = vmatpush.msra.mxu0 0.0
      %1459 = vmatpush.msra.mxu0 0.0
      %1460 = vmatpush.msra.mxu0 0.0
      %1461 = vmatpush.msra.mxu0 0.0
      %1462 = vmatpush.msra.mxu0 0.0
      %1463 = vmatpush.msra.mxu0 0.0
      %1464 = vmatpush.msra.mxu0 0.0
      %1465 = vmatpush.msra.mxu0 0.0
      %1466 = vmatpush.msra.mxu0 0.0
      %1467 = vmatpush.msra.mxu0 0.0
      %1468 = vmatpush.msra.mxu0 0.0
      %1469 = vmatpush.msra.mxu0 0.0
      %1470 = vmatpush.msra.mxu0 %v1450
      %1471 = vmatmul.f32.gmra.mxu0 %v1453
      %v1472 = vpop.f32.mrf.mxu0
      %v1473 = vadd.f32 0.0, %v1472
      %1474 = vdwg.mxu0
      %1475 = vrot.lane.b32.xlu0 %v1212, 64
      %v1476 = vpop.permute.xlu0 %1475
      %v1479 = vsel %vm653, %v1407, 0
      %1481 = vmatpush.msra.mxu0 0.0
      %1482 = vmatpush.msra.mxu0 0.0
      %1483 = vmatpush.msra.mxu0 0.0
      %1484 = vmatpush.msra.mxu0 0.0
      %1485 = vmatpush.msra.mxu0 0.0
      %1486 = vmatpush.msra.mxu0 0.0
      %1487 = vmatpush.msra.mxu0 0.0
      %1488 = vmatpush.msra.mxu0 0.0
      %1489 = vmatpush.msra.mxu0 0.0
      %1490 = vmatpush.msra.mxu0 0.0
      %1491 = vmatpush.msra.mxu0 0.0
      %1492 = vmatpush.msra.mxu0 0.0
      %1493 = vmatpush.msra.mxu0 0.0
      %1494 = vmatpush.msra.mxu0 0.0
      %1495 = vmatpush.msra.mxu0 0.0
      %1496 = vmatpush.msra.mxu0 %v1476
      %1497 = vmatmul.f32.gmra.mxu0 %v1479
      %v1498 = vpop.f32.mrf.mxu0
      %v1499 = vadd.f32 0.0, %v1498
      %1500 = vdwg.mxu0
      %1501 = vrot.lane.b32.xlu0 %v1214, 64
      %v1502 = vpop.permute.xlu0 %1501
      %v1505 = vsel %vm653, %v1422, 0
      %1507 = vmatpush.msra.mxu0 0.0
      %1508 = vmatpush.msra.mxu0 0.0
      %1509 = vmatpush.msra.mxu0 0.0
      %1510 = vmatpush.msra.mxu0 0.0
      %1511 = vmatpush.msra.mxu0 0.0
      %1512 = vmatpush.msra.mxu0 0.0
      %1513 = vmatpush.msra.mxu0 0.0
      %1514 = vmatpush.msra.mxu0 0.0
      %1515 = vmatpush.msra.mxu0 0.0
      %1516 = vmatpush.msra.mxu0 0.0
      %1517 = vmatpush.msra.mxu0 0.0
      %1518 = vmatpush.msra.mxu0 0.0
      %1519 = vmatpush.msra.mxu0 0.0
      %1520 = vmatpush.msra.mxu0 0.0
      %1521 = vmatpush.msra.mxu0 0.0
      %1522 = vmatpush.msra.mxu0 %v1502
      %1523 = vmatmul.f32.gmra.mxu0 %v1505
      %v1524 = vpop.f32.mrf.mxu0
      %v1525 = vadd.f32 0.0, %v1524
      %1526 = vdwg.mxu0
      %1528 = vrot.lane.b32.xlu0 %v1473, 8
      %v1529 = vpop.permute.xlu0 %1528
      %1532 = vrot.lane.b32.xlu0 %v1499, 16
      %v1533 = vpop.permute.xlu0 %1532
      %1536 = vrot.lane.b32.xlu0 %v1525, 24
      %v1537 = vpop.permute.xlu0 %1536
      %v1539 = vsel %vm653, %v1447, %v1529
      %v1540 = vsel %vm980, %v1539, %v1533
      %v1541 = vsel %vm982, %v1540, %v1537
      %s1542 = scalar_lea.vmem %s7, 32
      %v1543 = vld [vmem:[%s1542] sm:$0xff]
      %v1544 = vld [vmem:[%s1542 + $0x8] sm:$0xff]
      %v1545 = vld [vmem:[%s1542 + $0x10] sm:$0xff]
      %v1546 = vld [vmem:[%s1542 + $0x18] sm:$0xff]
      %v1547 = vperm.slane %v1174, 0
      %v1549 = vsel %vm575, %v1541, 0
      %1551 = vmatpush.msra.mxu0 0.0
      %1552 = vmatpush.msra.mxu0 0.0
      %1553 = vmatpush.msra.mxu0 0.0
      %1554 = vmatpush.msra.mxu0 0.0
      %1555 = vmatpush.msra.mxu0 0.0
      %1556 = vmatpush.msra.mxu0 0.0
      %1557 = vmatpush.msra.mxu0 0.0
      %1558 = vmatpush.msra.mxu0 0.0
      %1559 = vmatpush.msra.mxu0 0.0
      %1560 = vmatpush.msra.mxu0 0.0
      %1561 = vmatpush.msra.mxu0 0.0
      %1562 = vmatpush.msra.mxu0 0.0
      %1563 = vmatpush.msra.mxu0 %v1546
      %1564 = vmatpush.msra.mxu0 %v1545
      %1565 = vmatpush.msra.mxu0 %v1544
      %1566 = vmatpush.msra.mxu0 %v1543
      %1567 = vmatmul.f32.gmra.mxu0 %v1549
      %v1568 = vpop.f32.mrf.mxu0
      %v1569 = vadd.f32 %v1547, %v1568
      %1570 = vdwg.mxu0
      %v1571 = vadd.f32 %v1569, %v1172
      %v1572 = vsel %vm575, %v1571, 0.0
      %1573 = vadd.xlane.f32.xlu0 %v1572
      %v1574 = vpop.xlane.xlu0 %1573
      %v1575 = vmul.f32 %v1574, %v585
      %v1576 = vsub.f32 %v1571, %v1575
      %v1577 = vmul.f32 %v1576, %v1576
      %v1578 = vsel %vm575, %v1577, 0.0
      %1579 = vadd.xlane.f32.xlu0 %v1578
      %v1580 = vpop.xlane.xlu0 %1579
      %v1581 = vmul.f32 %v1580, %v585
      %v1582 = vadd.f32 %v1581, 1e-12
      %v1583 = vrsqrt.pop %v1582
      %v1584 = vmul.f32 %v1583, %v1582
      %v1585 = vmul.f32 %v1584, %v1583
      %v1586 = vmul.f32 0.5, %v1585
      %v1587 = vsub.f32 1.5, %v1586
      %v1588 = vmul.f32 %v1583, %v1587
      %vm1589 = vweird.f32 %v1582
      %vm1590 = vweird.f32 %v1583
      %vm1591 = vmor %vm1589, %vm1590
      %v1592 = vsel %vm1591, %v1583, %v1588
      %v1593 = vmul.f32 %v1576, %v1592
      %v1594 = vperm.slane %v1174, 1
      %v1595 = vmul.f32 %v1593, %v1594
      %v1596 = vperm.slane %v1174, 2
      %v1597 = vadd.f32 %v1595, %v1596
      %s1598 = scalar_lea.vmem %s9, 32
      %v1599 = vld [vmem:[%s1598] sm:$0xff]
      %v1600 = vld [vmem:[%s1598 + $0x8] sm:$0xff]
      %v1601 = vld [vmem:[%s1598 + $0x10] sm:$0xff]
      %v1602 = vld [vmem:[%s1598 + $0x18] sm:$0xff]
      %s1603 = scalar_lea.vmem %s10, 1
      %v1604 = vld [vmem:[%s1603] sm:$0x1]
      %v1606 = vperm.slane %v1604, 0
      %v1609 = vsel %vm575, %v1597, 0
      %1611 = vmatpush.msra.mxu0 0.0
      %1612 = vmatpush.msra.mxu0 0.0
      %1613 = vmatpush.msra.mxu0 0.0
      %1614 = vmatpush.msra.mxu0 0.0
      %1615 = vmatpush.msra.mxu0 0.0
      %1616 = vmatpush.msra.mxu0 0.0
      %1617 = vmatpush.msra.mxu0 0.0
      %1618 = vmatpush.msra.mxu0 0.0
      %1619 = vmatpush.msra.mxu0 0.0
      %1620 = vmatpush.msra.mxu0 0.0
      %1621 = vmatpush.msra.mxu0 0.0
      %1622 = vmatpush.msra.mxu0 0.0
      %1623 = vmatpush.msra.mxu0 %v1602
      %1624 = vmatpush.msra.mxu0 %v1601
      %1625 = vmatpush.msra.mxu0 %v1600
      %1626 = vmatpush.msra.mxu0 %v1599
      %1627 = vmatmul.f32.gmra.mxu0 %v1609
      %v1628 = vpop.f32.mrf.mxu0
      %v1629 = vadd.f32 %v1606, %v1628
      %1630 = vdwg.mxu0
      %v1631 = vmul.f32 %v1629, 0.5
      %v1632 = vmul.f32 %v1629, 0.70710677
      %v1633 = vmul.f32 %v1632, %v1632
      %v1634 = vmin.f32 16.0, %v1633
      %v1635 = vmul.f32 %v1634, 2.1237322e-06
      %v1636 = vadd.f32 %v1635, 0.00028619796
      %v1637 = vmul.f32 %v1634, %v1636
      %v1638 = vadd.f32 %v1637, 0.0036580483
      %v1639 = vmul.f32 %v1634, %v1638
      %v1640 = vadd.f32 %v1639, 0.05243302
      %v1641 = vmul.f32 %v1634, %v1640
      %v1642 = vadd.f32 %v1641, 0.18741608
      %v1643 = vmul.f32 %v1634, %v1642
      %v1644 = vadd.f32 %v1643, 1.1283791
      %v1645 = vmul.f32 %v1632, %v1644
      %v1646 = vmul.f32 %v1634, 3.8918573e-05
      %v1647 = vadd.f32 %v1646, 0.001143296
      %v1648 = vmul.f32 %v1634, %v1647
      %v1649 = vadd.f32 %v1648, 0.014752088
      %v1650 = vmul.f32 %v1634, %v1649
      %v1651 = vadd.f32 %v1650, 0.112945676
      %v1652 = vmul.f32 %v1634, %v1651
      %v1653 = vadd.f32 %v1652, 0.4994258
      %v1654 = vmul.f32 %v1634, %v1653
      %v1655 = vadd.f32 %v1654, 1.0
      %v1656 = vrcp.pop %v1655
      %v1657 = vmul.f32 %v1655, %v1656
      %v1658 = vsub.f32 1.0, %v1657
      %v1659 = vmul.f32 %v1656, %v1658
      %v1660 = vadd.f32 %v1656, %v1659
      %vm1661 = vweird.f32 %v1655
      %vm1662 = vweird.f32 %v1656
      %vm1663 = vmor %vm1661, %vm1662
      %v1664 = vsel %vm1663, %v1656, %v1660
      %v1665 = vand.u32 2147483647, %v1655
      %vm1666 = vcmp.eq.f32.partialorder %v1665, 8.507059e+37
      %v1667 = vand.u32 %v1655, 2147483648
      %v1668 = vor.u32 1.1754944e-38, %v1667
      %v1669 = vsel %vm1666, %v1668, %v1664
      %v1670 = vmul.f32 %v1645, %v1669
      %v1671 = vmin.f32 %v1670, 1.0
      %v1672 = vmax.f32 %v1671, -1.0
      %v1673 = vadd.f32 %v1672, 1.0
      %v1674 = vmul.f32 %v1631, %v1673
      %s1675 = scalar_lea.vmem %s11, 64
      %v1676 = vld [vmem:[%s1675] sm:$0xff]
      %v1677 = vld [vmem:[%s1675 + $0x8] sm:$0xff]
      %v1678 = vld [vmem:[%s1675 + $0x10] sm:$0xff]
      %v1679 = vld [vmem:[%s1675 + $0x18] sm:$0xff]
      %v1680 = vld [vmem:[%s1675 + $0x20] sm:$0xff]
      %v1681 = vld [vmem:[%s1675 + $0x28] sm:$0xff]
      %v1682 = vld [vmem:[%s1675 + $0x30] sm:$0xff]
      %v1683 = vld [vmem:[%s1675 + $0x38] sm:$0xff]
      %v1684 = vperm.slane %v1174, 3
      %v1686 = vsel %vm549, %v1674, 0
      %1688 = vmatpush.msra.mxu0 0.0
      %1689 = vmatpush.msra.mxu0 0.0
      %1690 = vmatpush.msra.mxu0 0.0
      %1691 = vmatpush.msra.mxu0 0.0
      %1692 = vmatpush.msra.mxu0 0.0
      %1693 = vmatpush.msra.mxu0 0.0
      %1694 = vmatpush.msra.mxu0 0.0
      %1695 = vmatpush.msra.mxu0 0.0
      %1696 = vmatpush.msra.mxu0 %v1683
      %1697 = vmatpush.msra.mxu0 %v1682
      %1698 = vmatpush.msra.mxu0 %v1681
      %1699 = vmatpush.msra.mxu0 %v1680
      %1700 = vmatpush.msra.mxu0 %v1679
      %1701 = vmatpush.msra.mxu0 %v1678
      %1702 = vmatpush.msra.mxu0 %v1677
      %1703 = vmatpush.msra.mxu0 %v1676
      %1704 = vmatmul.f32.gmra.mxu0 %v1686
      %v1705 = vpop.f32.mrf.mxu0
      %v1706 = vadd.f32 %v1684, %v1705
      %1707 = vdwg.mxu0
      %v1708 = vadd.f32 %v1706, %v1597
      %v1709 = vsel %vm575, %v1708, 0.0
      %1710 = vadd.xlane.f32.xlu0 %v1709
      %v1711 = vpop.xlane.xlu0 %1710
      %v1712 = vmul.f32 %v1711, %v585
      %v1713 = vsub.f32 %v1708, %v1712
      %v1714 = vmul.f32 %v1713, %v1713
      %v1715 = vsel %vm575, %v1714, 0.0
      %1716 = vadd.xlane.f32.xlu0 %v1715
      %v1717 = vpop.xlane.xlu0 %1716
      %v1718 = vmul.f32 %v1717, %v585
      %v1719 = vadd.f32 %v1718, 1e-12
      %v1720 = vrsqrt.pop %v1719
      %v1721 = vmul.f32 %v1720, %v1719
      %v1722 = vmul.f32 %v1721, %v1720
      %v1723 = vmul.f32 0.5, %v1722
      %v1724 = vsub.f32 1.5, %v1723
      %v1725 = vmul.f32 %v1720, %v1724
      %vm1726 = vweird.f32 %v1719
      %vm1727 = vweird.f32 %v1720
      %vm1728 = vmor %vm1726, %vm1727
      %v1729 = vsel %vm1728, %v1720, %v1725
      %v1730 = vmul.f32 %v1713, %v1729
      %v1731 = vperm.slane %v1174, 4
      %v1732 = vmul.f32 %v1730, %v1731
      %v1733 = vperm.slane %v1174, 5
      %v1734 = vadd.f32 %v1732, %v1733
      %v1735 = vld [vmem:[%s12] sm:$0xff]
      %v1736 = vld [vmem:[%s12 + $0x8] sm:$0xff]
      %v1737 = vld [vmem:[%s12 + $0x10] sm:$0xff]
      %v1738 = vld [vmem:[%s12 + $0x18] sm:$0xff]
      %v1739 = vld [vmem:[%s13] sm:$0x1]
      %v1741 = vsel %vm575, %v1734, 0
      %1743 = vmatpush.msra.mxu0 0.0
      %1744 = vmatpush.msra.mxu0 0.0
      %1745 = vmatpush.msra.mxu0 0.0
      %1746 = vmatpush.msra.mxu0 0.0
      %1747 = vmatpush.msra.mxu0 0.0
      %1748 = vmatpush.msra.mxu0 0.0
      %1749 = vmatpush.msra.mxu0 0.0
      %1750 = vmatpush.msra.mxu0 0.0
      %1751 = vmatpush.msra.mxu0 0.0
      %1752 = vmatpush.msra.mxu0 0.0
      %1753 = vmatpush.msra.mxu0 0.0
      %1754 = vmatpush.msra.mxu0 0.0
      %1755 = vmatpush.msra.mxu0 %v1738
      %1756 = vmatpush.msra.mxu0 %v1737
      %1757 = vmatpush.msra.mxu0 %v1736
      %1758 = vmatpush.msra.mxu0 %v1735
      %1759 = vmatmul.f32.gmra.mxu0 %v1741
      %v1760 = vpop.f32.mrf.mxu0
      %v1761 = vadd.f32 %v1739, %v1760
      %1762 = vdwg.mxu0
      %v1763 = vtanh.pop %v1761
      %v1764 = vld [vmem:[%s14] sm:$0xff]
      %v1765 = vld [vmem:[%s14 + $0x8] sm:$0xff]
      %v1766 = vld [vmem:[%s14 + $0x10] sm:$0xff]
      %v1767 = vld [vmem:[%s14 + $0x18] sm:$0xff]
      %v1768 = vld [vmem:[#allocation2] sm:$0x1]
      %v1770 = vsel %vm575, %v1763, 0
      %1772 = vmatpush.msra.mxu0 0.0
      %1773 = vmatpush.msra.mxu0 0.0
      %1774 = vmatpush.msra.mxu0 0.0
      %1775 = vmatpush.msra.mxu0 0.0
      %1776 = vmatpush.msra.mxu0 0.0
      %1777 = vmatpush.msra.mxu0 0.0
      %1778 = vmatpush.msra.mxu0 0.0
      %1779 = vmatpush.msra.mxu0 0.0
      %1780 = vmatpush.msra.mxu0 0.0
      %1781 = vmatpush.msra.mxu0 0.0
      %1782 = vmatpush.msra.mxu0 0.0
      %1783 = vmatpush.msra.mxu0 0.0
      %1784 = vmatpush.msra.mxu0 %v1767
      %1785 = vmatpush.msra.mxu0 %v1766
      %1786 = vmatpush.msra.mxu0 %v1765
      %1787 = vmatpush.msra.mxu0 %v1764
      %1788 = vmatmul.f32.gmra.mxu0 %v1770
      %v1789 = vpop.f32.mrf.mxu0
      %v1790 = vadd.f32 %v1768, %v1789
      %1791 = vdwg.mxu0
      %vm1792 = vcmask 0
      %1793 = vst.msk [vmem:[%s530] sm:$0x1] %vm1792, %v1790
      %p1794 = scmp.lt.s32.totalorder %s29, 1
      %s1795 = scalar_select %p1794, %s29, 1
      %s1796 = scalar_lea.vmem %s16, %s1795
      // Predicated region
      $region85: #{tpu_custom_call.1} parent=83 // pred_check
        %p1797 = pneg %p393
      $region86: #{tpu_custom_call.1} parent=83 // pred_check_branch
        %1799 = sbr.rel (%p1797) target = $region88
      $region87: #{tpu_custom_call.1} parent=83 // pred_region
        _
      $region88: #{tpu_custom_call.1} parent=83 // pred_fallthru
        _
    $region84: #{tpu_custom_call.1} parent=5 // pred_fallthru
      _
    %p1800 = scmp.le.s32.totalorder 2, %s24
    // Predicated region
    $region89: #{tpu_custom_call.1} parent=5 // pred_check
      %p1801 = pneg %p1800
    $region90: #{tpu_custom_call.1} parent=5 // pred_check_branch
      %1803 = sbr.rel (%p1801) target = $region92
    $region91: #{tpu_custom_call.1} parent=5 // pred_region
      %s1804 = ssub.s32 %s24, 2
      // Predicated region
      $region93: #{tpu_custom_call.1} parent=91 // pred_check
        %p1805 = pneg %p399
      $region94: #{tpu_custom_call.1} parent=91 // pred_check_branch
        %1807 = sbr.rel (%p1805) target = $region96
      $region95: #{tpu_custom_call.1} parent=91 // pred_region
        %p1808 = scmp.lt.s32.totalorder %s30, 1
        %s1809 = scalar_select %p1808, %s30, 1
        %s1810 = scalar_lea.vmem %s16, %s1809
      $region96: #{tpu_custom_call.1} parent=91 // pred_fallthru
        _
    $region92: #{tpu_custom_call.1} parent=5 // pred_fallthru
      _
  $region6: #{tpu_custom_call.1} parent=0 // loop_footer
    %s28 = sadd.s32 1, %s24
  $region7: #{tpu_custom_call.1} parent=0 // loop_footer_branch
    %23 = sbr.rel target = $region3
  $region8: #{tpu_custom_call.1} parent=0 // loop_exit
    _

</llo_original>
